<compile_context>
chip_gen: v7x
topology: tpu7x:2x2x1
jax: 0.10.0
libtpu: 0.0.40
codegen_flags: <defaults>
</compile_context>

<pallas_src>
import functools

import jax
import jax.numpy as jnp
from jax.experimental import pallas as pl
from jax.experimental.pallas import tpu as pltpu


def seqvae_kernel(
    # inputs
    x_ref,        # (T*B, Din)   time-major, batch-padded, flattened input
    eps_ref,      # (B, L)       reparameterization noise
    wih_e_ref,    # (Din, 4H)    encoder LSTM W_ih^T
    whh_e_ref,    # (H, 4H)      encoder LSTM W_hh^T
    b_e_ref,      # (1, 4H)      encoder LSTM (b_ih + b_hh)
    wmlv_ref,     # (H, 2L)      [mean_fc | log_var_fc] W^T, fused
    bmlv_ref,     # (1, 2L)      [mean_b | log_var_b], fused
    wih_d_ref,    # (L, 4H)      decoder LSTM W_ih^T
    whh_d_ref,    # (H, 4H)      decoder LSTM W_hh^T
    b_d_ref,      # (1, 4H)      decoder LSTM (b_ih + b_hh)
    wout_ref,     # (H, Dout)    fc_out W^T
    bout_ref,     # (1, Dout)
    # outputs
    out_ref,      # (T*B, Dout)
    mean_ref,     # (B, L)
    logvar_ref,   # (B, L)
    *,
    T, B,
):
    f32 = jnp.float32
    H = whh_e_ref.shape[0]
    L = mean_ref.shape[1]

    def lstm_cell(gates, c):
        # PyTorch gate order along the 4H lane axis: i, f, g, o.  4H == 128 lanes
        # -> one full-vreg sigmoid pass covers all gates in a single EUP op (the
        # g lanes are free filler, not an extra pass).
        sig = jax.nn.sigmoid(gates)
        g = jnp.tanh(gates[:, 2 * H:3 * H])
        i = sig[:, 0 * H:1 * H]
        f = sig[:, 1 * H:2 * H]
        o = sig[:, 3 * H:4 * H]
        c_new = f * c + i * g
        h_new = o * jnp.tanh(c_new)
        return h_new, c_new

    # ---------------- Encoder: hoisted input projection (one MXU call), kept in
    # vregs — no VMEM scratch, per-step access is a static vreg slice. ----------
    xg = (
        jnp.dot(x_ref[...], wih_e_ref[...], preferred_element_type=f32)
        + b_e_ref[...]
    )                                                        # (T*B, 4H)
    whh_e = whh_e_ref[...]

    h = jnp.zeros((B, H), f32)
    c = jnp.zeros((B, H), f32)
    for t in range(T):   # static unroll; only h @ W_hh sits on the serial path
        gates = xg[t * B:(t + 1) * B, :] + jnp.dot(
            h, whh_e, preferred_element_type=f32
        )
        h, c = lstm_cell(gates, c)

    # ---------------- Fused mean / log_var projection from the final CELL state
    # (matches the PyTorch module, which uses `cell`). --------------------------
    mlv = jnp.dot(c, wmlv_ref[...], preferred_element_type=f32) + bmlv_ref[...]
    mean = mlv[:, :L]
    log_var = mlv[:, L:]
    mean_ref[...] = mean
    logvar_ref[...] = log_var

    # ---------------- Reparameterize -------------------------------------------
    z = mean + eps_ref[...] * jnp.exp(0.5 * log_var)         # (B, L)

    # ---------------- Decoder: constant z input -> loop-invariant projection ----
    zg = jnp.dot(z, wih_d_ref[...], preferred_element_type=f32) + b_d_ref[...]
    whh_d = whh_d_ref[...]

    h = jnp.zeros((B, H), f32)
    c = jnp.zeros((B, H), f32)
    hs = []
    for t in range(T):   # static unroll; collect h values in vregs
        gates = zg + jnp.dot(h, whh_d, preferred_element_type=f32)
        h, c = lstm_cell(gates, c)
        hs.append(h)

    # ---------------- Deferred output projection: one matmul + one contiguous
    # store (no per-step masked stores, no scratch round trip). ------------------
    h_all = jnp.concatenate(hs, axis=0)                      # (T*B, H), tile-aligned concat
    out_ref[...] = (
        jnp.dot(h_all, wout_ref[...], preferred_element_type=f32) + bout_ref[...]
    ).astype(out_ref.dtype)


def init_params(key, input_dim, hidden_dim, latent_dim):
    """Deterministic synthetic parameters matching the PyTorch module shapes."""
    ks = jax.random.split(key, 14)
    u = lambda k, shape, s: jax.random.uniform(k, shape, jnp.float32, -s, s)
    sh = 1.0 / jnp.sqrt(hidden_dim)
    return dict(
        # encoder nn.LSTM(input_dim, hidden_dim)
        enc_w_ih=u(ks[0], (4 * hidden_dim, input_dim), sh),
        enc_w_hh=u(ks[1], (4 * hidden_dim, hidden_dim), sh),
        enc_b_ih=u(ks[2], (4 * hidden_dim,), sh),
        enc_b_hh=u(ks[3], (4 * hidden_dim,), sh),
        # mean_fc / log_var_fc : nn.Linear(hidden_dim, latent_dim)
        mean_w=u(ks[4], (latent_dim, hidden_dim), sh),
        mean_b=u(ks[5], (latent_dim,), sh),
        lv_w=u(ks[6], (latent_dim, hidden_dim), sh),
        lv_b=u(ks[7], (latent_dim,), sh),
        # decoder nn.LSTM(latent_dim, hidden_dim)
        dec_w_ih=u(ks[8], (4 * hidden_dim, latent_dim), sh),
        dec_w_hh=u(ks[9], (4 * hidden_dim, hidden_dim), sh),
        dec_b_ih=u(ks[10], (4 * hidden_dim,), sh),
        dec_b_hh=u(ks[11], (4 * hidden_dim,), sh),
        # fc_out : nn.Linear(hidden_dim, input_dim)
        out_w=u(ks[12], (input_dim, hidden_dim), sh),
        out_b=u(ks[13], (input_dim,), sh),
    )


@jax.jit
def seqvae_forward(x, eps, params):
    """x: (B, T, Din) f32, eps: (B, L) f32 -> (out (B,T,Din), mean (B,L), log_var (B,L))."""
    B, T, Din = x.shape
    H = params["enc_w_hh"].shape[1]
    L = params["mean_w"].shape[0]
    Dout = params["out_w"].shape[0]

    # Pad batch to a multiple of 8 (f32 sublanes); padded rows are discarded after.
    Bp = ((B + 7) // 8) * 8
    pad = Bp - B
    x_p = jnp.pad(x.astype(jnp.float32), ((0, pad), (0, 0), (0, 0)))
    eps_p = jnp.pad(eps.astype(jnp.float32), ((0, pad), (0, 0)))

    # Time-major, flattened: (T, Bp, Din) -> (T*Bp, Din)  (XLA fuses these copies).
    x_tm = jnp.transpose(x_p, (1, 0, 2)).reshape(T * Bp, Din)

    # Fuse mean_fc | log_var_fc into one projection.
    wmlv = jnp.concatenate([params["mean_w"].T, params["lv_w"].T], axis=1)    # (H, 2L)
    bmlv = jnp.concatenate([params["mean_b"], params["lv_b"]]).reshape(1, 2 * L)

    args = (
        x_tm,
        eps_p,
        params["enc_w_ih"].T,                                        # (Din, 4H)
        params["enc_w_hh"].T,                                        # (H, 4H)
        (params["enc_b_ih"] + params["enc_b_hh"]).reshape(1, 4 * H),
        wmlv, bmlv,
        params["dec_w_ih"].T,                                        # (L, 4H)
        params["dec_w_hh"].T,                                        # (H, 4H)
        (params["dec_b_ih"] + params["dec_b_hh"]).reshape(1, 4 * H),
        params["out_w"].T, params["out_b"].reshape(1, Dout),
    )

    vmem = pl.BlockSpec(memory_space=pltpu.MemorySpace.VMEM)
    out_flat, mean, log_var = pl.pallas_call(
        functools.partial(seqvae_kernel, T=T, B=Bp),
        out_shape=(
            jax.ShapeDtypeStruct((T * Bp, Dout), jnp.float32),
            jax.ShapeDtypeStruct((Bp, L), jnp.float32),
            jax.ShapeDtypeStruct((Bp, L), jnp.float32),
        ),
        in_specs=[vmem] * len(args),
        out_specs=(vmem, vmem, vmem),
    )(*args)

    out = jnp.transpose(out_flat.reshape(T, Bp, Dout), (1, 0, 2))[:B]
    return out, mean[:B], log_var[:B]


def seqvae_forward_ref(x, eps, params):
    """Pure-JAX reference mirroring the PyTorch forward (same eps)."""
    B, T, Din = x.shape
    H = params["enc_w_hh"].shape[1]

    def cell(gates, c):
        i = jax.nn.sigmoid(gates[:, :H])
        f = jax.nn.sigmoid(gates[:, H:2 * H])
        g = jnp.tanh(gates[:, 2 * H:3 * H])
        o = jax.nn.sigmoid(gates[:, 3 * H:])
        c = f * c + i * g
        return o * jnp.tanh(c), c

    h = jnp.zeros((B, H)); c = jnp.zeros((B, H))
    b_e = params["enc_b_ih"] + params["enc_b_hh"]
    for t in range(T):
        gates = x[:, t, :] @ params["enc_w_ih"].T + h @ params["enc_w_hh"].T + b_e
        h, c = cell(gates, c)
    mean = c @ params["mean_w"].T + params["mean_b"]
    log_var = c @ params["lv_w"].T + params["lv_b"]
    z = mean + eps * jnp.exp(0.5 * log_var)

    h = jnp.zeros((B, H)); cc = jnp.zeros((B, H))
    b_d = params["dec_b_ih"] + params["dec_b_hh"]
    outs = []
    for t in range(T):
        gates = z @ params["dec_w_ih"].T + h @ params["dec_w_hh"].T + b_d
        h, cc = cell(gates, cc)
        outs.append(h @ params["out_w"].T + params["out_b"])
    return jnp.stack(outs, axis=1), mean, log_var


if __name__ == "__main__":
    # Small shapes consistent with the module: input_dim=2, hidden=32, latent=16.
    B, T, Din, H, L = 2, 8, 2, 32, 16

    key = jax.random.PRNGKey(0)
    k_x, k_eps, k_p = jax.random.split(key, 3)
    x = jax.random.normal(k_x, (B, T, Din), jnp.float32)
    eps = jax.random.normal(k_eps, (B, L), jnp.float32)   # reparameterization noise
    params = init_params(k_p, Din, H, L)

    out, mean, log_var = seqvae_forward(x, eps, params)
    jax.block_until_ready((out, mean, log_var))

    out_r, mean_r, lv_r = seqvae_forward_ref(x, eps, params)
    assert out.shape == (B, T, Din) and mean.shape == (B, L) and log_var.shape == (B, L)
    assert jnp.allclose(out, out_r, atol=1e-5, rtol=1e-5)
    assert jnp.allclose(mean, mean_r, atol=1e-5, rtol=1e-5)
    assert jnp.allclose(log_var, lv_r, atol=1e-5, rtol=1e-5)

    print("KERNEL_OK")
</pallas_src>

<mosaic_0001>
module attributes {stable_mosaic.version = 11 : i64} {
  func.func @seqvae_kernel(%arg0: memref<64x2xf32, #tpu.memory_space<vmem>>, %arg1: memref<8x16xf32, #tpu.memory_space<vmem>>, %arg2: memref<2x128xf32, #tpu.memory_space<vmem>>, %arg3: memref<32x128xf32, #tpu.memory_space<vmem>>, %arg4: memref<1x128xf32, #tpu.memory_space<vmem>>, %arg5: memref<32x32xf32, #tpu.memory_space<vmem>>, %arg6: memref<1x32xf32, #tpu.memory_space<vmem>>, %arg7: memref<16x128xf32, #tpu.memory_space<vmem>>, %arg8: memref<32x128xf32, #tpu.memory_space<vmem>>, %arg9: memref<1x128xf32, #tpu.memory_space<vmem>>, %arg10: memref<32x2xf32, #tpu.memory_space<vmem>>, %arg11: memref<1x2xf32, #tpu.memory_space<vmem>>, %arg12: memref<64x2xf32, #tpu.memory_space<vmem>>, %arg13: memref<8x16xf32, #tpu.memory_space<vmem>>, %arg14: memref<8x16xf32, #tpu.memory_space<vmem>>) attributes {dimension_semantics = [], scalar_prefetch = 0 : i64, scratch_operands = 0 : i64, tpu.core_type = #tpu.core_type<tc>} {
    %c0 = arith.constant 0 : index
    %c0_0 = arith.constant 0 : index
    %0 = vector.load %arg0[%c0, %c0_0] : memref<64x2xf32, #tpu.memory_space<vmem>>, vector<64x2xf32>
    %c0_1 = arith.constant 0 : index
    %c0_2 = arith.constant 0 : index
    %1 = vector.load %arg2[%c0_1, %c0_2] : memref<2x128xf32, #tpu.memory_space<vmem>>, vector<2x128xf32>
    %cst = arith.constant dense<0.000000e+00> : vector<64x128xf32>
    %2 = tpu.matmul %0, %1, %cst {dimension_numbers = #tpu.dot_dimension_numbers<[1], [0], [0], [1], [0, 0, 1, 1], [], []>} : vector<64x2xf32>, vector<2x128xf32>, vector<64x128xf32> -> vector<64x128xf32>
    %c0_3 = arith.constant 0 : index
    %c0_4 = arith.constant 0 : index
    %3 = vector.load %arg4[%c0_3, %c0_4] : memref<1x128xf32, #tpu.memory_space<vmem>>, vector<1x128xf32>
    %4 = vector.broadcast %3 : vector<1x128xf32> to vector<64x128xf32>
    %5 = arith.addf %2, %4 : vector<64x128xf32>
    %c0_5 = arith.constant 0 : index
    %c0_6 = arith.constant 0 : index
    %6 = vector.load %arg3[%c0_5, %c0_6] : memref<32x128xf32, #tpu.memory_space<vmem>>, vector<32x128xf32>
    %cst_7 = arith.constant 0.000000e+00 : f32
    %7 = vector.broadcast %cst_7 : f32 to vector<8x32xf32>
    %cst_8 = arith.constant 0.000000e+00 : f32
    %8 = vector.broadcast %cst_8 : f32 to vector<8x32xf32>
    %9 = vector.extract_strided_slice %5 {offsets = [0, 0], sizes = [8, 128], strides = [1, 1]} : vector<64x128xf32> to vector<8x128xf32>
    %cst_9 = arith.constant dense<0.000000e+00> : vector<8x128xf32>
    %10 = tpu.matmul %7, %6, %cst_9 {dimension_numbers = #tpu.dot_dimension_numbers<[1], [0], [0], [1], [0, 0, 1, 1], [], []>} : vector<8x32xf32>, vector<32x128xf32>, vector<8x128xf32> -> vector<8x128xf32>
    %11 = arith.addf %9, %10 : vector<8x128xf32>
    %12 = arith.negf %11 : vector<8x128xf32>
    %13 = math.exp %12 : vector<8x128xf32>
    %cst_10 = arith.constant 1.000000e+00 : f32
    %14 = vector.broadcast %cst_10 : f32 to vector<8x128xf32>
    %15 = arith.addf %14, %13 : vector<8x128xf32>
    %16 = arith.divf %14, %15 : vector<8x128xf32>
    %17 = vector.extract_strided_slice %11 {offsets = [0, 64], sizes = [8, 32], strides = [1, 1]} : vector<8x128xf32> to vector<8x32xf32>
    %18 = math.tanh %17 : vector<8x32xf32>
    %19 = vector.extract_strided_slice %16 {offsets = [0, 0], sizes = [8, 32], strides = [1, 1]} : vector<8x128xf32> to vector<8x32xf32>
    %20 = vector.extract_strided_slice %16 {offsets = [0, 32], sizes = [8, 32], strides = [1, 1]} : vector<8x128xf32> to vector<8x32xf32>
    %21 = vector.extract_strided_slice %16 {offsets = [0, 96], sizes = [8, 32], strides = [1, 1]} : vector<8x128xf32> to vector<8x32xf32>
    %22 = arith.mulf %20, %8 : vector<8x32xf32>
    %23 = arith.mulf %19, %18 : vector<8x32xf32>
    %24 = arith.addf %22, %23 : vector<8x32xf32>
    %25 = math.tanh %24 : vector<8x32xf32>
    %26 = arith.mulf %21, %25 : vector<8x32xf32>
    %27 = vector.extract_strided_slice %5 {offsets = [8, 0], sizes = [8, 128], strides = [1, 1]} : vector<64x128xf32> to vector<8x128xf32>
    %cst_11 = arith.constant dense<0.000000e+00> : vector<8x128xf32>
    %28 = tpu.matmul %26, %6, %cst_11 {dimension_numbers = #tpu.dot_dimension_numbers<[1], [0], [0], [1], [0, 0, 1, 1], [], []>} : vector<8x32xf32>, vector<32x128xf32>, vector<8x128xf32> -> vector<8x128xf32>
    %29 = arith.addf %27, %28 : vector<8x128xf32>
    %30 = arith.negf %29 : vector<8x128xf32>
    %31 = math.exp %30 : vector<8x128xf32>
    %cst_12 = arith.constant 1.000000e+00 : f32
    %32 = vector.broadcast %cst_12 : f32 to vector<8x128xf32>
    %33 = arith.addf %32, %31 : vector<8x128xf32>
    %34 = arith.divf %32, %33 : vector<8x128xf32>
    %35 = vector.extract_strided_slice %29 {offsets = [0, 64], sizes = [8, 32], strides = [1, 1]} : vector<8x128xf32> to vector<8x32xf32>
    %36 = math.tanh %35 : vector<8x32xf32>
    %37 = vector.extract_strided_slice %34 {offsets = [0, 0], sizes = [8, 32], strides = [1, 1]} : vector<8x128xf32> to vector<8x32xf32>
    %38 = vector.extract_strided_slice %34 {offsets = [0, 32], sizes = [8, 32], strides = [1, 1]} : vector<8x128xf32> to vector<8x32xf32>
    %39 = vector.extract_strided_slice %34 {offsets = [0, 96], sizes = [8, 32], strides = [1, 1]} : vector<8x128xf32> to vector<8x32xf32>
    %40 = arith.mulf %38, %24 : vector<8x32xf32>
    %41 = arith.mulf %37, %36 : vector<8x32xf32>
    %42 = arith.addf %40, %41 : vector<8x32xf32>
    %43 = math.tanh %42 : vector<8x32xf32>
    %44 = arith.mulf %39, %43 : vector<8x32xf32>
    %45 = vector.extract_strided_slice %5 {offsets = [16, 0], sizes = [8, 128], strides = [1, 1]} : vector<64x128xf32> to vector<8x128xf32>
    %cst_13 = arith.constant dense<0.000000e+00> : vector<8x128xf32>
    %46 = tpu.matmul %44, %6, %cst_13 {dimension_numbers = #tpu.dot_dimension_numbers<[1], [0], [0], [1], [0, 0, 1, 1], [], []>} : vector<8x32xf32>, vector<32x128xf32>, vector<8x128xf32> -> vector<8x128xf32>
    %47 = arith.addf %45, %46 : vector<8x128xf32>
    %48 = arith.negf %47 : vector<8x128xf32>
    %49 = math.exp %48 : vector<8x128xf32>
    %cst_14 = arith.constant 1.000000e+00 : f32
    %50 = vector.broadcast %cst_14 : f32 to vector<8x128xf32>
    %51 = arith.addf %50, %49 : vector<8x128xf32>
    %52 = arith.divf %50, %51 : vector<8x128xf32>
    %53 = vector.extract_strided_slice %47 {offsets = [0, 64], sizes = [8, 32], strides = [1, 1]} : vector<8x128xf32> to vector<8x32xf32>
    %54 = math.tanh %53 : vector<8x32xf32>
    %55 = vector.extract_strided_slice %52 {offsets = [0, 0], sizes = [8, 32], strides = [1, 1]} : vector<8x128xf32> to vector<8x32xf32>
    %56 = vector.extract_strided_slice %52 {offsets = [0, 32], sizes = [8, 32], strides = [1, 1]} : vector<8x128xf32> to vector<8x32xf32>
    %57 = vector.extract_strided_slice %52 {offsets = [0, 96], sizes = [8, 32], strides = [1, 1]} : vector<8x128xf32> to vector<8x32xf32>
    %58 = arith.mulf %56, %42 : vector<8x32xf32>
    %59 = arith.mulf %55, %54 : vector<8x32xf32>
    %60 = arith.addf %58, %59 : vector<8x32xf32>
    %61 = math.tanh %60 : vector<8x32xf32>
    %62 = arith.mulf %57, %61 : vector<8x32xf32>
    %63 = vector.extract_strided_slice %5 {offsets = [24, 0], sizes = [8, 128], strides = [1, 1]} : vector<64x128xf32> to vector<8x128xf32>
    %cst_15 = arith.constant dense<0.000000e+00> : vector<8x128xf32>
    %64 = tpu.matmul %62, %6, %cst_15 {dimension_numbers = #tpu.dot_dimension_numbers<[1], [0], [0], [1], [0, 0, 1, 1], [], []>} : vector<8x32xf32>, vector<32x128xf32>, vector<8x128xf32> -> vector<8x128xf32>
    %65 = arith.addf %63, %64 : vector<8x128xf32>
    %66 = arith.negf %65 : vector<8x128xf32>
    %67 = math.exp %66 : vector<8x128xf32>
    %cst_16 = arith.constant 1.000000e+00 : f32
    %68 = vector.broadcast %cst_16 : f32 to vector<8x128xf32>
    %69 = arith.addf %68, %67 : vector<8x128xf32>
    %70 = arith.divf %68, %69 : vector<8x128xf32>
    %71 = vector.extract_strided_slice %65 {offsets = [0, 64], sizes = [8, 32], strides = [1, 1]} : vector<8x128xf32> to vector<8x32xf32>
    %72 = math.tanh %71 : vector<8x32xf32>
    %73 = vector.extract_strided_slice %70 {offsets = [0, 0], sizes = [8, 32], strides = [1, 1]} : vector<8x128xf32> to vector<8x32xf32>
    %74 = vector.extract_strided_slice %70 {offsets = [0, 32], sizes = [8, 32], strides = [1, 1]} : vector<8x128xf32> to vector<8x32xf32>
    %75 = vector.extract_strided_slice %70 {offsets = [0, 96], sizes = [8, 32], strides = [1, 1]} : vector<8x128xf32> to vector<8x32xf32>
    %76 = arith.mulf %74, %60 : vector<8x32xf32>
    %77 = arith.mulf %73, %72 : vector<8x32xf32>
    %78 = arith.addf %76, %77 : vector<8x32xf32>
    %79 = math.tanh %78 : vector<8x32xf32>
    %80 = arith.mulf %75, %79 : vector<8x32xf32>
    %81 = vector.extract_strided_slice %5 {offsets = [32, 0], sizes = [8, 128], strides = [1, 1]} : vector<64x128xf32> to vector<8x128xf32>
    %cst_17 = arith.constant dense<0.000000e+00> : vector<8x128xf32>
    %82 = tpu.matmul %80, %6, %cst_17 {dimension_numbers = #tpu.dot_dimension_numbers<[1], [0], [0], [1], [0, 0, 1, 1], [], []>} : vector<8x32xf32>, vector<32x128xf32>, vector<8x128xf32> -> vector<8x128xf32>
    %83 = arith.addf %81, %82 : vector<8x128xf32>
    %84 = arith.negf %83 : vector<8x128xf32>
    %85 = math.exp %84 : vector<8x128xf32>
    %cst_18 = arith.constant 1.000000e+00 : f32
    %86 = vector.broadcast %cst_18 : f32 to vector<8x128xf32>
    %87 = arith.addf %86, %85 : vector<8x128xf32>
    %88 = arith.divf %86, %87 : vector<8x128xf32>
    %89 = vector.extract_strided_slice %83 {offsets = [0, 64], sizes = [8, 32], strides = [1, 1]} : vector<8x128xf32> to vector<8x32xf32>
    %90 = math.tanh %89 : vector<8x32xf32>
    %91 = vector.extract_strided_slice %88 {offsets = [0, 0], sizes = [8, 32], strides = [1, 1]} : vector<8x128xf32> to vector<8x32xf32>
    %92 = vector.extract_strided_slice %88 {offsets = [0, 32], sizes = [8, 32], strides = [1, 1]} : vector<8x128xf32> to vector<8x32xf32>
    %93 = vector.extract_strided_slice %88 {offsets = [0, 96], sizes = [8, 32], strides = [1, 1]} : vector<8x128xf32> to vector<8x32xf32>
    %94 = arith.mulf %92, %78 : vector<8x32xf32>
    %95 = arith.mulf %91, %90 : vector<8x32xf32>
    %96 = arith.addf %94, %95 : vector<8x32xf32>
    %97 = math.tanh %96 : vector<8x32xf32>
    %98 = arith.mulf %93, %97 : vector<8x32xf32>
    %99 = vector.extract_strided_slice %5 {offsets = [40, 0], sizes = [8, 128], strides = [1, 1]} : vector<64x128xf32> to vector<8x128xf32>
    %cst_19 = arith.constant dense<0.000000e+00> : vector<8x128xf32>
    %100 = tpu.matmul %98, %6, %cst_19 {dimension_numbers = #tpu.dot_dimension_numbers<[1], [0], [0], [1], [0, 0, 1, 1], [], []>} : vector<8x32xf32>, vector<32x128xf32>, vector<8x128xf32> -> vector<8x128xf32>
    %101 = arith.addf %99, %100 : vector<8x128xf32>
    %102 = arith.negf %101 : vector<8x128xf32>
    %103 = math.exp %102 : vector<8x128xf32>
    %cst_20 = arith.constant 1.000000e+00 : f32
    %104 = vector.broadcast %cst_20 : f32 to vector<8x128xf32>
    %105 = arith.addf %104, %103 : vector<8x128xf32>
    %106 = arith.divf %104, %105 : vector<8x128xf32>
    %107 = vector.extract_strided_slice %101 {offsets = [0, 64], sizes = [8, 32], strides = [1, 1]} : vector<8x128xf32> to vector<8x32xf32>
    %108 = math.tanh %107 : vector<8x32xf32>
    %109 = vector.extract_strided_slice %106 {offsets = [0, 0], sizes = [8, 32], strides = [1, 1]} : vector<8x128xf32> to vector<8x32xf32>
    %110 = vector.extract_strided_slice %106 {offsets = [0, 32], sizes = [8, 32], strides = [1, 1]} : vector<8x128xf32> to vector<8x32xf32>
    %111 = vector.extract_strided_slice %106 {offsets = [0, 96], sizes = [8, 32], strides = [1, 1]} : vector<8x128xf32> to vector<8x32xf32>
    %112 = arith.mulf %110, %96 : vector<8x32xf32>
    %113 = arith.mulf %109, %108 : vector<8x32xf32>
    %114 = arith.addf %112, %113 : vector<8x32xf32>
    %115 = math.tanh %114 : vector<8x32xf32>
    %116 = arith.mulf %111, %115 : vector<8x32xf32>
    %117 = vector.extract_strided_slice %5 {offsets = [48, 0], sizes = [8, 128], strides = [1, 1]} : vector<64x128xf32> to vector<8x128xf32>
    %cst_21 = arith.constant dense<0.000000e+00> : vector<8x128xf32>
    %118 = tpu.matmul %116, %6, %cst_21 {dimension_numbers = #tpu.dot_dimension_numbers<[1], [0], [0], [1], [0, 0, 1, 1], [], []>} : vector<8x32xf32>, vector<32x128xf32>, vector<8x128xf32> -> vector<8x128xf32>
    %119 = arith.addf %117, %118 : vector<8x128xf32>
    %120 = arith.negf %119 : vector<8x128xf32>
    %121 = math.exp %120 : vector<8x128xf32>
    %cst_22 = arith.constant 1.000000e+00 : f32
    %122 = vector.broadcast %cst_22 : f32 to vector<8x128xf32>
    %123 = arith.addf %122, %121 : vector<8x128xf32>
    %124 = arith.divf %122, %123 : vector<8x128xf32>
    %125 = vector.extract_strided_slice %119 {offsets = [0, 64], sizes = [8, 32], strides = [1, 1]} : vector<8x128xf32> to vector<8x32xf32>
    %126 = math.tanh %125 : vector<8x32xf32>
    %127 = vector.extract_strided_slice %124 {offsets = [0, 0], sizes = [8, 32], strides = [1, 1]} : vector<8x128xf32> to vector<8x32xf32>
    %128 = vector.extract_strided_slice %124 {offsets = [0, 32], sizes = [8, 32], strides = [1, 1]} : vector<8x128xf32> to vector<8x32xf32>
    %129 = vector.extract_strided_slice %124 {offsets = [0, 96], sizes = [8, 32], strides = [1, 1]} : vector<8x128xf32> to vector<8x32xf32>
    %130 = arith.mulf %128, %114 : vector<8x32xf32>
    %131 = arith.mulf %127, %126 : vector<8x32xf32>
    %132 = arith.addf %130, %131 : vector<8x32xf32>
    %133 = math.tanh %132 : vector<8x32xf32>
    %134 = arith.mulf %129, %133 : vector<8x32xf32>
    %135 = vector.extract_strided_slice %5 {offsets = [56, 0], sizes = [8, 128], strides = [1, 1]} : vector<64x128xf32> to vector<8x128xf32>
    %cst_23 = arith.constant dense<0.000000e+00> : vector<8x128xf32>
    %136 = tpu.matmul %134, %6, %cst_23 {dimension_numbers = #tpu.dot_dimension_numbers<[1], [0], [0], [1], [0, 0, 1, 1], [], []>} : vector<8x32xf32>, vector<32x128xf32>, vector<8x128xf32> -> vector<8x128xf32>
    %137 = arith.addf %135, %136 : vector<8x128xf32>
    %138 = arith.negf %137 : vector<8x128xf32>
    %139 = math.exp %138 : vector<8x128xf32>
    %cst_24 = arith.constant 1.000000e+00 : f32
    %140 = vector.broadcast %cst_24 : f32 to vector<8x128xf32>
    %141 = arith.addf %140, %139 : vector<8x128xf32>
    %142 = arith.divf %140, %141 : vector<8x128xf32>
    %143 = vector.extract_strided_slice %137 {offsets = [0, 64], sizes = [8, 32], strides = [1, 1]} : vector<8x128xf32> to vector<8x32xf32>
    %144 = math.tanh %143 : vector<8x32xf32>
    %145 = vector.extract_strided_slice %142 {offsets = [0, 0], sizes = [8, 32], strides = [1, 1]} : vector<8x128xf32> to vector<8x32xf32>
    %146 = vector.extract_strided_slice %142 {offsets = [0, 32], sizes = [8, 32], strides = [1, 1]} : vector<8x128xf32> to vector<8x32xf32>
    %147 = arith.mulf %146, %132 : vector<8x32xf32>
    %148 = arith.mulf %145, %144 : vector<8x32xf32>
    %149 = arith.addf %147, %148 : vector<8x32xf32>
    %c0_25 = arith.constant 0 : index
    %c0_26 = arith.constant 0 : index
    %150 = vector.load %arg5[%c0_25, %c0_26] : memref<32x32xf32, #tpu.memory_space<vmem>>, vector<32x32xf32>
    %cst_27 = arith.constant dense<0.000000e+00> : vector<8x32xf32>
    %151 = tpu.matmul %149, %150, %cst_27 {dimension_numbers = #tpu.dot_dimension_numbers<[1], [0], [0], [1], [0, 0, 1, 1], [], []>} : vector<8x32xf32>, vector<32x32xf32>, vector<8x32xf32> -> vector<8x32xf32>
    %c0_28 = arith.constant 0 : index
    %c0_29 = arith.constant 0 : index
    %152 = vector.load %arg6[%c0_28, %c0_29] : memref<1x32xf32, #tpu.memory_space<vmem>>, vector<1x32xf32>
    %153 = vector.broadcast %152 : vector<1x32xf32> to vector<8x32xf32>
    %154 = arith.addf %151, %153 : vector<8x32xf32>
    %155 = vector.extract_strided_slice %154 {offsets = [0, 0], sizes = [8, 16], strides = [1, 1]} : vector<8x32xf32> to vector<8x16xf32>
    %156 = vector.extract_strided_slice %154 {offsets = [0, 16], sizes = [8, 16], strides = [1, 1]} : vector<8x32xf32> to vector<8x16xf32>
    %c0_30 = arith.constant 0 : index
    %c0_31 = arith.constant 0 : index
    %157 = vector.load %arg13[%c0_30, %c0_31] : memref<8x16xf32, #tpu.memory_space<vmem>>, vector<8x16xf32>
    tpu.vector_store %arg13[%c0_30, %c0_31], %155 {strides = array<i32>} : memref<8x16xf32, #tpu.memory_space<vmem>>, vector<8x16xf32>,
    %c0_32 = arith.constant 0 : index
    %c0_33 = arith.constant 0 : index
    %158 = vector.load %arg14[%c0_32, %c0_33] : memref<8x16xf32, #tpu.memory_space<vmem>>, vector<8x16xf32>
    tpu.vector_store %arg14[%c0_32, %c0_33], %156 {strides = array<i32>} : memref<8x16xf32, #tpu.memory_space<vmem>>, vector<8x16xf32>,
    %c0_34 = arith.constant 0 : index
    %c0_35 = arith.constant 0 : index
    %159 = vector.load %arg1[%c0_34, %c0_35] : memref<8x16xf32, #tpu.memory_space<vmem>>, vector<8x16xf32>
    %cst_36 = arith.constant 5.000000e-01 : f32
    %160 = vector.broadcast %cst_36 : f32 to vector<8x16xf32>
    %161 = arith.mulf %160, %156 : vector<8x16xf32>
    %162 = math.exp %161 : vector<8x16xf32>
    %163 = arith.mulf %159, %162 : vector<8x16xf32>
    %164 = arith.addf %155, %163 : vector<8x16xf32>
    %c0_37 = arith.constant 0 : index
    %c0_38 = arith.constant 0 : index
    %165 = vector.load %arg7[%c0_37, %c0_38] : memref<16x128xf32, #tpu.memory_space<vmem>>, vector<16x128xf32>
    %cst_39 = arith.constant dense<0.000000e+00> : vector<8x128xf32>
    %166 = tpu.matmul %164, %165, %cst_39 {dimension_numbers = #tpu.dot_dimension_numbers<[1], [0], [0], [1], [0, 0, 1, 1], [], []>} : vector<8x16xf32>, vector<16x128xf32>, vector<8x128xf32> -> vector<8x128xf32>
    %c0_40 = arith.constant 0 : index
    %c0_41 = arith.constant 0 : index
    %167 = vector.load %arg9[%c0_40, %c0_41] : memref<1x128xf32, #tpu.memory_space<vmem>>, vector<1x128xf32>
    %168 = vector.broadcast %167 : vector<1x128xf32> to vector<8x128xf32>
    %169 = arith.addf %166, %168 : vector<8x128xf32>
    %c0_42 = arith.constant 0 : index
    %c0_43 = arith.constant 0 : index
    %170 = vector.load %arg8[%c0_42, %c0_43] : memref<32x128xf32, #tpu.memory_space<vmem>>, vector<32x128xf32>
    %cst_44 = arith.constant 0.000000e+00 : f32
    %171 = vector.broadcast %cst_44 : f32 to vector<8x32xf32>
    %cst_45 = arith.constant 0.000000e+00 : f32
    %172 = vector.broadcast %cst_45 : f32 to vector<8x32xf32>
    %cst_46 = arith.constant dense<0.000000e+00> : vector<8x128xf32>
    %173 = tpu.matmul %171, %170, %cst_46 {dimension_numbers = #tpu.dot_dimension_numbers<[1], [0], [0], [1], [0, 0, 1, 1], [], []>} : vector<8x32xf32>, vector<32x128xf32>, vector<8x128xf32> -> vector<8x128xf32>
    %174 = arith.addf %169, %173 : vector<8x128xf32>
    %175 = arith.negf %174 : vector<8x128xf32>
    %176 = math.exp %175 : vector<8x128xf32>
    %cst_47 = arith.constant 1.000000e+00 : f32
    %177 = vector.broadcast %cst_47 : f32 to vector<8x128xf32>
    %178 = arith.addf %177, %176 : vector<8x128xf32>
    %179 = arith.divf %177, %178 : vector<8x128xf32>
    %180 = vector.extract_strided_slice %174 {offsets = [0, 64], sizes = [8, 32], strides = [1, 1]} : vector<8x128xf32> to vector<8x32xf32>
    %181 = math.tanh %180 : vector<8x32xf32>
    %182 = vector.extract_strided_slice %179 {offsets = [0, 0], sizes = [8, 32], strides = [1, 1]} : vector<8x128xf32> to vector<8x32xf32>
    %183 = vector.extract_strided_slice %179 {offsets = [0, 32], sizes = [8, 32], strides = [1, 1]} : vector<8x128xf32> to vector<8x32xf32>
    %184 = vector.extract_strided_slice %179 {offsets = [0, 96], sizes = [8, 32], strides = [1, 1]} : vector<8x128xf32> to vector<8x32xf32>
    %185 = arith.mulf %183, %172 : vector<8x32xf32>
    %186 = arith.mulf %182, %181 : vector<8x32xf32>
    %187 = arith.addf %185, %186 : vector<8x32xf32>
    %188 = math.tanh %187 : vector<8x32xf32>
    %189 = arith.mulf %184, %188 : vector<8x32xf32>
    %cst_48 = arith.constant dense<0.000000e+00> : vector<8x128xf32>
    %190 = tpu.matmul %189, %170, %cst_48 {dimension_numbers = #tpu.dot_dimension_numbers<[1], [0], [0], [1], [0, 0, 1, 1], [], []>} : vector<8x32xf32>, vector<32x128xf32>, vector<8x128xf32> -> vector<8x128xf32>
    %191 = arith.addf %169, %190 : vector<8x128xf32>
    %192 = arith.negf %191 : vector<8x128xf32>
    %193 = math.exp %192 : vector<8x128xf32>
    %cst_49 = arith.constant 1.000000e+00 : f32
    %194 = vector.broadcast %cst_49 : f32 to vector<8x128xf32>
    %195 = arith.addf %194, %193 : vector<8x128xf32>
    %196 = arith.divf %194, %195 : vector<8x128xf32>
    %197 = vector.extract_strided_slice %191 {offsets = [0, 64], sizes = [8, 32], strides = [1, 1]} : vector<8x128xf32> to vector<8x32xf32>
    %198 = math.tanh %197 : vector<8x32xf32>
    %199 = vector.extract_strided_slice %196 {offsets = [0, 0], sizes = [8, 32], strides = [1, 1]} : vector<8x128xf32> to vector<8x32xf32>
    %200 = vector.extract_strided_slice %196 {offsets = [0, 32], sizes = [8, 32], strides = [1, 1]} : vector<8x128xf32> to vector<8x32xf32>
    %201 = vector.extract_strided_slice %196 {offsets = [0, 96], sizes = [8, 32], strides = [1, 1]} : vector<8x128xf32> to vector<8x32xf32>
    %202 = arith.mulf %200, %187 : vector<8x32xf32>
    %203 = arith.mulf %199, %198 : vector<8x32xf32>
    %204 = arith.addf %202, %203 : vector<8x32xf32>
    %205 = math.tanh %204 : vector<8x32xf32>
    %206 = arith.mulf %201, %205 : vector<8x32xf32>
    %cst_50 = arith.constant dense<0.000000e+00> : vector<8x128xf32>
    %207 = tpu.matmul %206, %170, %cst_50 {dimension_numbers = #tpu.dot_dimension_numbers<[1], [0], [0], [1], [0, 0, 1, 1], [], []>} : vector<8x32xf32>, vector<32x128xf32>, vector<8x128xf32> -> vector<8x128xf32>
    %208 = arith.addf %169, %207 : vector<8x128xf32>
    %209 = arith.negf %208 : vector<8x128xf32>
    %210 = math.exp %209 : vector<8x128xf32>
    %cst_51 = arith.constant 1.000000e+00 : f32
    %211 = vector.broadcast %cst_51 : f32 to vector<8x128xf32>
    %212 = arith.addf %211, %210 : vector<8x128xf32>
    %213 = arith.divf %211, %212 : vector<8x128xf32>
    %214 = vector.extract_strided_slice %208 {offsets = [0, 64], sizes = [8, 32], strides = [1, 1]} : vector<8x128xf32> to vector<8x32xf32>
    %215 = math.tanh %214 : vector<8x32xf32>
    %216 = vector.extract_strided_slice %213 {offsets = [0, 0], sizes = [8, 32], strides = [1, 1]} : vector<8x128xf32> to vector<8x32xf32>
    %217 = vector.extract_strided_slice %213 {offsets = [0, 32], sizes = [8, 32], strides = [1, 1]} : vector<8x128xf32> to vector<8x32xf32>
    %218 = vector.extract_strided_slice %213 {offsets = [0, 96], sizes = [8, 32], strides = [1, 1]} : vector<8x128xf32> to vector<8x32xf32>
    %219 = arith.mulf %217, %204 : vector<8x32xf32>
    %220 = arith.mulf %216, %215 : vector<8x32xf32>
    %221 = arith.addf %219, %220 : vector<8x32xf32>
    %222 = math.tanh %221 : vector<8x32xf32>
    %223 = arith.mulf %218, %222 : vector<8x32xf32>
    %cst_52 = arith.constant dense<0.000000e+00> : vector<8x128xf32>
    %224 = tpu.matmul %223, %170, %cst_52 {dimension_numbers = #tpu.dot_dimension_numbers<[1], [0], [0], [1], [0, 0, 1, 1], [], []>} : vector<8x32xf32>, vector<32x128xf32>, vector<8x128xf32> -> vector<8x128xf32>
    %225 = arith.addf %169, %224 : vector<8x128xf32>
    %226 = arith.negf %225 : vector<8x128xf32>
    %227 = math.exp %226 : vector<8x128xf32>
    %cst_53 = arith.constant 1.000000e+00 : f32
    %228 = vector.broadcast %cst_53 : f32 to vector<8x128xf32>
    %229 = arith.addf %228, %227 : vector<8x128xf32>
    %230 = arith.divf %228, %229 : vector<8x128xf32>
    %231 = vector.extract_strided_slice %225 {offsets = [0, 64], sizes = [8, 32], strides = [1, 1]} : vector<8x128xf32> to vector<8x32xf32>
    %232 = math.tanh %231 : vector<8x32xf32>
    %233 = vector.extract_strided_slice %230 {offsets = [0, 0], sizes = [8, 32], strides = [1, 1]} : vector<8x128xf32> to vector<8x32xf32>
    %234 = vector.extract_strided_slice %230 {offsets = [0, 32], sizes = [8, 32], strides = [1, 1]} : vector<8x128xf32> to vector<8x32xf32>
    %235 = vector.extract_strided_slice %230 {offsets = [0, 96], sizes = [8, 32], strides = [1, 1]} : vector<8x128xf32> to vector<8x32xf32>
    %236 = arith.mulf %234, %221 : vector<8x32xf32>
    %237 = arith.mulf %233, %232 : vector<8x32xf32>
    %238 = arith.addf %236, %237 : vector<8x32xf32>
    %239 = math.tanh %238 : vector<8x32xf32>
    %240 = arith.mulf %235, %239 : vector<8x32xf32>
    %cst_54 = arith.constant dense<0.000000e+00> : vector<8x128xf32>
    %241 = tpu.matmul %240, %170, %cst_54 {dimension_numbers = #tpu.dot_dimension_numbers<[1], [0], [0], [1], [0, 0, 1, 1], [], []>} : vector<8x32xf32>, vector<32x128xf32>, vector<8x128xf32> -> vector<8x128xf32>
    %242 = arith.addf %169, %241 : vector<8x128xf32>
    %243 = arith.negf %242 : vector<8x128xf32>
    %244 = math.exp %243 : vector<8x128xf32>
    %cst_55 = arith.constant 1.000000e+00 : f32
    %245 = vector.broadcast %cst_55 : f32 to vector<8x128xf32>
    %246 = arith.addf %245, %244 : vector<8x128xf32>
    %247 = arith.divf %245, %246 : vector<8x128xf32>
    %248 = vector.extract_strided_slice %242 {offsets = [0, 64], sizes = [8, 32], strides = [1, 1]} : vector<8x128xf32> to vector<8x32xf32>
    %249 = math.tanh %248 : vector<8x32xf32>
    %250 = vector.extract_strided_slice %247 {offsets = [0, 0], sizes = [8, 32], strides = [1, 1]} : vector<8x128xf32> to vector<8x32xf32>
    %251 = vector.extract_strided_slice %247 {offsets = [0, 32], sizes = [8, 32], strides = [1, 1]} : vector<8x128xf32> to vector<8x32xf32>
    %252 = vector.extract_strided_slice %247 {offsets = [0, 96], sizes = [8, 32], strides = [1, 1]} : vector<8x128xf32> to vector<8x32xf32>
    %253 = arith.mulf %251, %238 : vector<8x32xf32>
    %254 = arith.mulf %250, %249 : vector<8x32xf32>
    %255 = arith.addf %253, %254 : vector<8x32xf32>
    %256 = math.tanh %255 : vector<8x32xf32>
    %257 = arith.mulf %252, %256 : vector<8x32xf32>
    %cst_56 = arith.constant dense<0.000000e+00> : vector<8x128xf32>
    %258 = tpu.matmul %257, %170, %cst_56 {dimension_numbers = #tpu.dot_dimension_numbers<[1], [0], [0], [1], [0, 0, 1, 1], [], []>} : vector<8x32xf32>, vector<32x128xf32>, vector<8x128xf32> -> vector<8x128xf32>
    %259 = arith.addf %169, %258 : vector<8x128xf32>
    %260 = arith.negf %259 : vector<8x128xf32>
    %261 = math.exp %260 : vector<8x128xf32>
    %cst_57 = arith.constant 1.000000e+00 : f32
    %262 = vector.broadcast %cst_57 : f32 to vector<8x128xf32>
    %263 = arith.addf %262, %261 : vector<8x128xf32>
    %264 = arith.divf %262, %263 : vector<8x128xf32>
    %265 = vector.extract_strided_slice %259 {offsets = [0, 64], sizes = [8, 32], strides = [1, 1]} : vector<8x128xf32> to vector<8x32xf32>
    %266 = math.tanh %265 : vector<8x32xf32>
    %267 = vector.extract_strided_slice %264 {offsets = [0, 0], sizes = [8, 32], strides = [1, 1]} : vector<8x128xf32> to vector<8x32xf32>
    %268 = vector.extract_strided_slice %264 {offsets = [0, 32], sizes = [8, 32], strides = [1, 1]} : vector<8x128xf32> to vector<8x32xf32>
    %269 = vector.extract_strided_slice %264 {offsets = [0, 96], sizes = [8, 32], strides = [1, 1]} : vector<8x128xf32> to vector<8x32xf32>
    %270 = arith.mulf %268, %255 : vector<8x32xf32>
    %271 = arith.mulf %267, %266 : vector<8x32xf32>
    %272 = arith.addf %270, %271 : vector<8x32xf32>
    %273 = math.tanh %272 : vector<8x32xf32>
    %274 = arith.mulf %269, %273 : vector<8x32xf32>
    %cst_58 = arith.constant dense<0.000000e+00> : vector<8x128xf32>
    %275 = tpu.matmul %274, %170, %cst_58 {dimension_numbers = #tpu.dot_dimension_numbers<[1], [0], [0], [1], [0, 0, 1, 1], [], []>} : vector<8x32xf32>, vector<32x128xf32>, vector<8x128xf32> -> vector<8x128xf32>
    %276 = arith.addf %169, %275 : vector<8x128xf32>
    %277 = arith.negf %276 : vector<8x128xf32>
    %278 = math.exp %277 : vector<8x128xf32>
    %cst_59 = arith.constant 1.000000e+00 : f32
    %279 = vector.broadcast %cst_59 : f32 to vector<8x128xf32>
    %280 = arith.addf %279, %278 : vector<8x128xf32>
    %281 = arith.divf %279, %280 : vector<8x128xf32>
    %282 = vector.extract_strided_slice %276 {offsets = [0, 64], sizes = [8, 32], strides = [1, 1]} : vector<8x128xf32> to vector<8x32xf32>
    %283 = math.tanh %282 : vector<8x32xf32>
    %284 = vector.extract_strided_slice %281 {offsets = [0, 0], sizes = [8, 32], strides = [1, 1]} : vector<8x128xf32> to vector<8x32xf32>
    %285 = vector.extract_strided_slice %281 {offsets = [0, 32], sizes = [8, 32], strides = [1, 1]} : vector<8x128xf32> to vector<8x32xf32>
    %286 = vector.extract_strided_slice %281 {offsets = [0, 96], sizes = [8, 32], strides = [1, 1]} : vector<8x128xf32> to vector<8x32xf32>
    %287 = arith.mulf %285, %272 : vector<8x32xf32>
    %288 = arith.mulf %284, %283 : vector<8x32xf32>
    %289 = arith.addf %287, %288 : vector<8x32xf32>
    %290 = math.tanh %289 : vector<8x32xf32>
    %291 = arith.mulf %286, %290 : vector<8x32xf32>
    %cst_60 = arith.constant dense<0.000000e+00> : vector<8x128xf32>
    %292 = tpu.matmul %291, %170, %cst_60 {dimension_numbers = #tpu.dot_dimension_numbers<[1], [0], [0], [1], [0, 0, 1, 1], [], []>} : vector<8x32xf32>, vector<32x128xf32>, vector<8x128xf32> -> vector<8x128xf32>
    %293 = arith.addf %169, %292 : vector<8x128xf32>
    %294 = arith.negf %293 : vector<8x128xf32>
    %295 = math.exp %294 : vector<8x128xf32>
    %cst_61 = arith.constant 1.000000e+00 : f32
    %296 = vector.broadcast %cst_61 : f32 to vector<8x128xf32>
    %297 = arith.addf %296, %295 : vector<8x128xf32>
    %298 = arith.divf %296, %297 : vector<8x128xf32>
    %299 = vector.extract_strided_slice %293 {offsets = [0, 64], sizes = [8, 32], strides = [1, 1]} : vector<8x128xf32> to vector<8x32xf32>
    %300 = math.tanh %299 : vector<8x32xf32>
    %301 = vector.extract_strided_slice %298 {offsets = [0, 0], sizes = [8, 32], strides = [1, 1]} : vector<8x128xf32> to vector<8x32xf32>
    %302 = vector.extract_strided_slice %298 {offsets = [0, 32], sizes = [8, 32], strides = [1, 1]} : vector<8x128xf32> to vector<8x32xf32>
    %303 = vector.extract_strided_slice %298 {offsets = [0, 96], sizes = [8, 32], strides = [1, 1]} : vector<8x128xf32> to vector<8x32xf32>
    %304 = arith.mulf %302, %289 : vector<8x32xf32>
    %305 = arith.mulf %301, %300 : vector<8x32xf32>
    %306 = arith.addf %304, %305 : vector<8x32xf32>
    %307 = math.tanh %306 : vector<8x32xf32>
    %308 = arith.mulf %303, %307 : vector<8x32xf32>
    %309 = tpu.concatenate %189, %206, %223, %240, %257, %274, %291, %308 in 0 : vector<8x32xf32>, vector<8x32xf32>, vector<8x32xf32>, vector<8x32xf32>, vector<8x32xf32>, vector<8x32xf32>, vector<8x32xf32>, vector<8x32xf32> -> vector<64x32xf32>
    %c0_62 = arith.constant 0 : index
    %c0_63 = arith.constant 0 : index
    %310 = vector.load %arg10[%c0_62, %c0_63] : memref<32x2xf32, #tpu.memory_space<vmem>>, vector<32x2xf32>
    %cst_64 = arith.constant dense<0.000000e+00> : vector<64x2xf32>
    %311 = tpu.matmul %309, %310, %cst_64 {dimension_numbers = #tpu.dot_dimension_numbers<[1], [0], [0], [1], [0, 0, 1, 1], [], []>} : vector<64x32xf32>, vector<32x2xf32>, vector<64x2xf32> -> vector<64x2xf32>
    %c0_65 = arith.constant 0 : index
    %c0_66 = arith.constant 0 : index
    %312 = vector.load %arg11[%c0_65, %c0_66] : memref<1x2xf32, #tpu.memory_space<vmem>>, vector<1x2xf32>
    %313 = vector.broadcast %312 : vector<1x2xf32> to vector<64x2xf32>
    %314 = arith.addf %311, %313 : vector<64x2xf32>
    %c0_67 = arith.constant 0 : index
    %c0_68 = arith.constant 0 : index
    %315 = vector.load %arg12[%c0_67, %c0_68] : memref<64x2xf32, #tpu.memory_space<vmem>>, vector<64x2xf32>
    tpu.vector_store %arg12[%c0_67, %c0_68], %314 {strides = array<i32>} : memref<64x2xf32, #tpu.memory_space<vmem>>, vector<64x2xf32>,
    return
  }
}

</mosaic_0001>

<llo_original>
// kernel: seqvae_forward.1
$region0: #{seqvae_forward.1}
  #allocation0 [shape = 'u32[]', space=smem, size = 0x4, offset = 0x4, fixed_abs, tag = 'smem constant byte address 0x4 - core index']
  #allocation1 [shape = 'u32[144,128]{1,0:T(1,128)}', space=vmem, size = 0x12000, scoped, tag = 'internal scratch']
  %s0 = inlined_call_operand.vmem [shape: f32[64,2], index: 0, kind: input, shape index: {}]
  %s1 = inlined_call_operand.vmem [shape: f32[8,16], index: 1, kind: input, shape index: {}]
  %s2 = inlined_call_operand.vmem [shape: f32[2,128], index: 2, kind: input, shape index: {}]
  %s3 = inlined_call_operand.vmem [shape: f32[32,128], index: 3, kind: input, shape index: {}]
  %s4 = inlined_call_operand.vmem [shape: f32[1,128], index: 4, kind: input, shape index: {}]
  %s5 = inlined_call_operand.vmem [shape: f32[32,32], index: 5, kind: input, shape index: {}]
  %s6 = inlined_call_operand.vmem [shape: f32[1,32], index: 6, kind: input, shape index: {}]
  %s7 = inlined_call_operand.vmem [shape: f32[16,128], index: 7, kind: input, shape index: {}]
  %s8 = inlined_call_operand.vmem [shape: f32[32,128], index: 8, kind: input, shape index: {}]
  %s9 = inlined_call_operand.vmem [shape: f32[1,128], index: 9, kind: input, shape index: {}]
  %s10 = inlined_call_operand.vmem [shape: f32[32,2], index: 10, kind: input, shape index: {}]
  %s11 = inlined_call_operand.vmem [shape: f32[1,2], index: 11, kind: input, shape index: {}]
  %s12 = inlined_call_operand.vmem [shape: f32[64,2], index: 12, kind: output, shape index: {0}]
  %s13 = inlined_call_operand.vmem [shape: f32[8,16], index: 13, kind: output, shape index: {1}]
  %s14 = inlined_call_operand.vmem [shape: f32[8,16], index: 14, kind: output, shape index: {2}]
  %15 = xla_tuple %s12, %s13, %s14
  %s16 = sld [smem:[#allocation0]]
  $region74: #{seqvae_forward.1} parent=0
    _
  %s18 = ssub.s32 1, %s16
  %s19 = scalar_select 0, %s18, %s16
  // Predicated region
  $region2: #{seqvae_forward.1} parent=0 // pred_check
    _
  $region3: #{seqvae_forward.1} parent=0 // pred_check_branch
    %21 = sbr.rel (0) target = $region5
  $region4: #{seqvae_forward.1} parent=0 // pred_region
    _
  $region5: #{seqvae_forward.1} parent=0 // pred_fallthru
    _
  // Predicated region
  $region6: #{seqvae_forward.1} parent=0 // pred_check
    _
  $region7: #{seqvae_forward.1} parent=0 // pred_check_branch
    %23 = sbr.rel (0) target = $region9
  $region8: #{seqvae_forward.1} parent=0 // pred_region
    _
  $region9: #{seqvae_forward.1} parent=0 // pred_fallthru
    _
  // Predicated region
  $region10: #{seqvae_forward.1} parent=0 // pred_check
    _
  $region11: #{seqvae_forward.1} parent=0 // pred_check_branch
    %25 = sbr.rel (0) target = $region13
  $region12: #{seqvae_forward.1} parent=0 // pred_region
    _
  $region13: #{seqvae_forward.1} parent=0 // pred_fallthru
    _
  // Predicated region
  $region14: #{seqvae_forward.1} parent=0 // pred_check
    _
  $region15: #{seqvae_forward.1} parent=0 // pred_check_branch
    %27 = sbr.rel (0) target = $region17
  $region16: #{seqvae_forward.1} parent=0 // pred_region
    _
  $region17: #{seqvae_forward.1} parent=0 // pred_fallthru
    _
  // Predicated region
  $region18: #{seqvae_forward.1} parent=0 // pred_check
    _
  $region19: #{seqvae_forward.1} parent=0 // pred_check_branch
    %29 = sbr.rel (0) target = $region21
  $region20: #{seqvae_forward.1} parent=0 // pred_region
    _
  $region21: #{seqvae_forward.1} parent=0 // pred_fallthru
    _
  // Predicated region
  $region22: #{seqvae_forward.1} parent=0 // pred_check
    _
  $region23: #{seqvae_forward.1} parent=0 // pred_check_branch
    %31 = sbr.rel (0) target = $region25
  $region24: #{seqvae_forward.1} parent=0 // pred_region
    _
  $region25: #{seqvae_forward.1} parent=0 // pred_fallthru
    _
  // Predicated region
  $region26: #{seqvae_forward.1} parent=0 // pred_check
    _
  $region27: #{seqvae_forward.1} parent=0 // pred_check_branch
    %33 = sbr.rel (0) target = $region29
  $region28: #{seqvae_forward.1} parent=0 // pred_region
    _
  $region29: #{seqvae_forward.1} parent=0 // pred_fallthru
    _
  // Predicated region
  $region30: #{seqvae_forward.1} parent=0 // pred_check
    _
  $region31: #{seqvae_forward.1} parent=0 // pred_check_branch
    %35 = sbr.rel (0) target = $region33
  $region32: #{seqvae_forward.1} parent=0 // pred_region
    _
  $region33: #{seqvae_forward.1} parent=0 // pred_fallthru
    _
  // Predicated region
  $region34: #{seqvae_forward.1} parent=0 // pred_check
    _
  $region35: #{seqvae_forward.1} parent=0 // pred_check_branch
    %37 = sbr.rel (0) target = $region37
  $region36: #{seqvae_forward.1} parent=0 // pred_region
    _
  $region37: #{seqvae_forward.1} parent=0 // pred_fallthru
    _
  // Predicated region
  $region38: #{seqvae_forward.1} parent=0 // pred_check
    _
  $region39: #{seqvae_forward.1} parent=0 // pred_check_branch
    %39 = sbr.rel (0) target = $region41
  $region40: #{seqvae_forward.1} parent=0 // pred_region
    _
  $region41: #{seqvae_forward.1} parent=0 // pred_fallthru
    _
  // Predicated region
  $region42: #{seqvae_forward.1} parent=0 // pred_check
    _
  $region43: #{seqvae_forward.1} parent=0 // pred_check_branch
    %41 = sbr.rel (0) target = $region45
  $region44: #{seqvae_forward.1} parent=0 // pred_region
    _
  $region45: #{seqvae_forward.1} parent=0 // pred_fallthru
    _
  // Predicated region
  $region46: #{seqvae_forward.1} parent=0 // pred_check
    _
  $region47: #{seqvae_forward.1} parent=0 // pred_check_branch
    %43 = sbr.rel (0) target = $region49
  $region48: #{seqvae_forward.1} parent=0 // pred_region
    _
  $region49: #{seqvae_forward.1} parent=0 // pred_fallthru
    _
  %v44 = vld [vmem:[%s0] sm:$0xff]
  %v45 = vld [vmem:[%s0 + $0x8] sm:$0xff]
  %v46 = vld [vmem:[%s0 + $0x10] sm:$0xff]
  %v47 = vld [vmem:[%s0 + $0x18] sm:$0xff]
  %v48 = vld [vmem:[%s0 + $0x20] sm:$0xff]
  %v49 = vld [vmem:[%s0 + $0x28] sm:$0xff]
  %v50 = vld [vmem:[%s0 + $0x30] sm:$0xff]
  %v51 = vld [vmem:[%s0 + $0x38] sm:$0xff]
  %v52 = vld [vmem:[%s2] sm:$0x3]
  %v53 = vld [vmem:[%s4] sm:$0x1]
  %v55 = vlaneseq
  %v56 = vshrl.u32 %v55, 7
  %v57 = vsub.s32 0, %v56
  %v58 = vrot.slane %v53, %v57
  %vm60 = vcmask 15360
  %v62 = vsel %vm60, %v44, 0
  %v65 = vsel %vm60, %v45, 0
  %v68 = vsel %vm60, %v46, 0
  %v71 = vsel %vm60, %v47, 0
  %v74 = vsel %vm60, %v48, 0
  %v77 = vsel %vm60, %v49, 0
  %v80 = vsel %vm60, %v50, 0
  %v83 = vsel %vm60, %v51, 0
  %vm85 = vcmask 1041408
  %v87 = vsel %vm85, %v52, 0
  %89 = vmatprep.subr.mxu0 0.0
  %90 = vmatpush1.msra.mxu0 %v87
  %91 = vmatprep.subr.mxu0 0.0
  %92 = vmatpush1.msra.mxu0 0.0
  %93 = vmatprep.subr.mxu0 0.0
  %94 = vmatpush1.msra.mxu0 0.0
  %95 = vmatprep.subr.mxu0 0.0
  %96 = vmatpush1.msra.mxu0 0.0
  %97 = vmatprep.subr.mxu0 0.0
  %98 = vmatpush1.msra.mxu0 0.0
  %99 = vmatprep.subr.mxu0 0.0
  %100 = vmatpush1.msra.mxu0 0.0
  %101 = vmatprep.subr.mxu0 0.0
  %102 = vmatpush1.msra.mxu0 0.0
  %103 = vmatprep.subr.mxu0 0.0
  %104 = vmatpush1.msra.mxu0 0.0
  %105 = vmatprep.subr.mxu0 0.0
  %106 = vmatpush1.msra.mxu0 0.0
  %107 = vmatprep.subr.mxu0 0.0
  %108 = vmatpush1.msra.mxu0 0.0
  %109 = vmatprep.subr.mxu0 0.0
  %110 = vmatpush1.msra.mxu0 0.0
  %111 = vmatprep.subr.mxu0 0.0
  %112 = vmatpush1.msra.mxu0 0.0
  %113 = vmatprep.subr.mxu0 0.0
  %114 = vmatpush1.msra.mxu0 0.0
  %115 = vmatprep.subr.mxu0 0.0
  %116 = vmatpush1.msra.mxu0 0.0
  %117 = vmatprep.subr.mxu0 0.0
  %118 = vmatpush1.msra.mxu0 0.0
  %119 = vmatprep.subr.mxu0 0.0
  %120 = vmatpush1.msra.mxu0 0.0
  %121 = vmatprep.subr.mxu0 0.0
  %122 = vmatpush1.msra.mxu0 0.0
  %123 = vmatprep.subr.mxu0 0.0
  %124 = vmatpush1.msra.mxu0 0.0
  %125 = vmatprep.subr.mxu0 0.0
  %126 = vmatpush1.msra.mxu0 0.0
  %127 = vmatprep.subr.mxu0 0.0
  %128 = vmatpush1.msra.mxu0 0.0
  %129 = vmatprep.subr.mxu0 0.0
  %130 = vmatpush1.msra.mxu0 0.0
  %131 = vmatprep.subr.mxu0 0.0
  %132 = vmatpush1.msra.mxu0 0.0
  %133 = vmatprep.subr.mxu0 0.0
  %134 = vmatpush1.msra.mxu0 0.0
  %135 = vmatprep.subr.mxu0 0.0
  %136 = vmatpush1.msra.mxu0 0.0
  %137 = vmatprep.subr.mxu0 0.0
  %138 = vmatpush1.msra.mxu0 0.0
  %139 = vmatprep.subr.mxu0 0.0
  %140 = vmatpush1.msra.mxu0 0.0
  %141 = vmatprep.subr.mxu0 0.0
  %142 = vmatpush1.msra.mxu0 0.0
  %143 = vmatprep.subr.mxu0 0.0
  %144 = vmatpush1.msra.mxu0 0.0
  %145 = vmatprep.subr.mxu0 0.0
  %146 = vmatpush1.msra.mxu0 0.0
  %147 = vmatprep.subr.mxu0 0.0
  %148 = vmatpush1.msra.mxu0 0.0
  %149 = vmatprep.subr.mxu0 0.0
  %150 = vmatpush1.msra.mxu0 0.0
  %151 = vmatprep.subr.mxu0 0.0
  %152 = vmatpush1.msra.mxu0 0.0
  %153 = vmatprep.mubr.f32.mxu0 0.0
  %154 = vmatmul.mubr.f32.gmra.mrb[0].mxu0 %v62
  %v155 = vpop.f32.mrb[0].mxu0
  %v156 = vadd.f32 %v58, %v155
  %v157 = vpop.f32.mrb[0].mxu0
  %158 = vmatprep.mubr.f32.mxu0 0.0
  %159 = vmatmul.mubr.f32.gmra.mrb[0].mxu0 %v65
  %v160 = vpop.f32.mrb[0].mxu0
  %v161 = vadd.f32 %v58, %v160
  %v162 = vpop.f32.mrb[0].mxu0
  %163 = vmatprep.mubr.f32.mxu0 0.0
  %164 = vmatmul.mubr.f32.gmra.mrb[0].mxu0 %v68
  %v165 = vpop.f32.mrb[0].mxu0
  %v166 = vadd.f32 %v58, %v165
  %v167 = vpop.f32.mrb[0].mxu0
  %168 = vmatprep.mubr.f32.mxu0 0.0
  %169 = vmatmul.mubr.f32.gmra.mrb[0].mxu0 %v71
  %v170 = vpop.f32.mrb[0].mxu0
  %v171 = vadd.f32 %v58, %v170
  %v172 = vpop.f32.mrb[0].mxu0
  %173 = vmatprep.mubr.f32.mxu0 0.0
  %174 = vmatmul.mubr.f32.gmra.mrb[0].mxu0 %v74
  %v175 = vpop.f32.mrb[0].mxu0
  %v176 = vadd.f32 %v58, %v175
  %v177 = vpop.f32.mrb[0].mxu0
  %178 = vmatprep.mubr.f32.mxu0 0.0
  %179 = vmatmul.mubr.f32.gmra.mrb[0].mxu0 %v77
  %v180 = vpop.f32.mrb[0].mxu0
  %v181 = vadd.f32 %v58, %v180
  %v182 = vpop.f32.mrb[0].mxu0
  %183 = vmatprep.mubr.f32.mxu0 0.0
  %184 = vmatmul.mubr.f32.gmra.mrb[0].mxu0 %v80
  %v185 = vpop.f32.mrb[0].mxu0
  %v186 = vadd.f32 %v58, %v185
  %v187 = vpop.f32.mrb[0].mxu0
  %188 = vmatprep.mubr.f32.mxu0 0.0
  %189 = vmatmul.mubr.f32.gmra.mrb[0].mxu0 %v83
  %v190 = vpop.f32.mrb[0].mxu0
  %v191 = vadd.f32 %v58, %v190
  %v192 = vpop.f32.mrb[0].mxu0
  %193 = vdwg.mxu0
  %v194 = vld [vmem:[%s3] sm:$0xff]
  %v195 = vld [vmem:[%s3 + $0x8] sm:$0xff]
  %v196 = vld [vmem:[%s3 + $0x10] sm:$0xff]
  %v197 = vld [vmem:[%s3 + $0x18] sm:$0xff]
  %vm198 = vcmask 261120
  %v200 = vsel %vm198, 0.0, 0
  %202 = vmatprep.subr.mxu0 0.0
  %203 = vmatpush1.msra.mxu0 %v194
  %204 = vmatprep.subr.mxu0 0.0
  %205 = vmatpush1.msra.mxu0 %v195
  %206 = vmatprep.subr.mxu0 0.0
  %207 = vmatpush1.msra.mxu0 %v196
  %208 = vmatprep.subr.mxu0 0.0
  %209 = vmatpush1.msra.mxu0 %v197
  %210 = vmatprep.subr.mxu0 0.0
  %211 = vmatpush1.msra.mxu0 0.0
  %212 = vmatprep.subr.mxu0 0.0
  %213 = vmatpush1.msra.mxu0 0.0
  %214 = vmatprep.subr.mxu0 0.0
  %215 = vmatpush1.msra.mxu0 0.0
  %216 = vmatprep.subr.mxu0 0.0
  %217 = vmatpush1.msra.mxu0 0.0
  %218 = vmatprep.subr.mxu0 0.0
  %219 = vmatpush1.msra.mxu0 0.0
  %220 = vmatprep.subr.mxu0 0.0
  %221 = vmatpush1.msra.mxu0 0.0
  %222 = vmatprep.subr.mxu0 0.0
  %223 = vmatpush1.msra.mxu0 0.0
  %224 = vmatprep.subr.mxu0 0.0
  %225 = vmatpush1.msra.mxu0 0.0
  %226 = vmatprep.subr.mxu0 0.0
  %227 = vmatpush1.msra.mxu0 0.0
  %228 = vmatprep.subr.mxu0 0.0
  %229 = vmatpush1.msra.mxu0 0.0
  %230 = vmatprep.subr.mxu0 0.0
  %231 = vmatpush1.msra.mxu0 0.0
  %232 = vmatprep.subr.mxu0 0.0
  %233 = vmatpush1.msra.mxu0 0.0
  %234 = vmatprep.subr.mxu0 0.0
  %235 = vmatpush1.msra.mxu0 0.0
  %236 = vmatprep.subr.mxu0 0.0
  %237 = vmatpush1.msra.mxu0 0.0
  %238 = vmatprep.subr.mxu0 0.0
  %239 = vmatpush1.msra.mxu0 0.0
  %240 = vmatprep.subr.mxu0 0.0
  %241 = vmatpush1.msra.mxu0 0.0
  %242 = vmatprep.subr.mxu0 0.0
  %243 = vmatpush1.msra.mxu0 0.0
  %244 = vmatprep.subr.mxu0 0.0
  %245 = vmatpush1.msra.mxu0 0.0
  %246 = vmatprep.subr.mxu0 0.0
  %247 = vmatpush1.msra.mxu0 0.0
  %248 = vmatprep.subr.mxu0 0.0
  %249 = vmatpush1.msra.mxu0 0.0
  %250 = vmatprep.subr.mxu0 0.0
  %251 = vmatpush1.msra.mxu0 0.0
  %252 = vmatprep.subr.mxu0 0.0
  %253 = vmatpush1.msra.mxu0 0.0
  %254 = vmatprep.subr.mxu0 0.0
  %255 = vmatpush1.msra.mxu0 0.0
  %256 = vmatprep.subr.mxu0 0.0
  %257 = vmatpush1.msra.mxu0 0.0
  %258 = vmatprep.subr.mxu0 0.0
  %259 = vmatpush1.msra.mxu0 0.0
  %260 = vmatprep.subr.mxu0 0.0
  %261 = vmatpush1.msra.mxu0 0.0
  %262 = vmatprep.subr.mxu0 0.0
  %263 = vmatpush1.msra.mxu0 0.0
  %264 = vmatprep.subr.mxu0 0.0
  %265 = vmatpush1.msra.mxu0 0.0
  %266 = vmatprep.mubr.f32.mxu0 0.0
  %267 = vmatmul.mubr.f32.gmra.mrb[0].mxu0 %v200
  %v268 = vpop.f32.mrb[0].mxu0
  %v269 = vadd.f32 0.0, %v268
  %v270 = vpop.f32.mrb[0].mxu0
  %271 = vdwg.mxu0
  %v272 = vadd.f32 %v156, %v269
  %v273 = vxor.u32 %v272, 2147483648
  %v274 = vmul.f32 %v273, 1.442695
  %v275 = vpow.pop %v274
  %v276 = vadd.f32 %v275, 1.0
  %v277 = vrcp.pop %v276
  %v278 = vmul.f32 1.0, %v277
  %v279 = vtanh.pop %v272
  %v280 = vmul.f32 %v278, 0.0
  %282 = vrot.lane.b32.xlu0 %v279, 64
  %v283 = vpop.permute.xlu0 %282
  %v285 = vmul.f32 %v278, %v283
  %287 = vrot.lane.b32.xlu0 %v285, 32
  %v288 = vpop.permute.xlu0 %287
  %v290 = vadd.f32 %v280, %v288
  %v291 = vtanh.pop %v290
  %293 = vrot.lane.b32.xlu0 %v291, 64
  %v294 = vpop.permute.xlu0 %293
  %v296 = vmul.f32 %v278, %v294
  %298 = vrot.lane.b32.xlu0 %v296, 32
  %v299 = vpop.permute.xlu0 %298
  %v300 = vsel %vm198, %v299, 0
  %302 = vmatprep.subr.mxu0 0.0
  %303 = vmatpush1.msra.mxu0 %v194
  %304 = vmatprep.subr.mxu0 0.0
  %305 = vmatpush1.msra.mxu0 %v195
  %306 = vmatprep.subr.mxu0 0.0
  %307 = vmatpush1.msra.mxu0 %v196
  %308 = vmatprep.subr.mxu0 0.0
  %309 = vmatpush1.msra.mxu0 %v197
  %310 = vmatprep.subr.mxu0 0.0
  %311 = vmatpush1.msra.mxu0 0.0
  %312 = vmatprep.subr.mxu0 0.0
  %313 = vmatpush1.msra.mxu0 0.0
  %314 = vmatprep.subr.mxu0 0.0
  %315 = vmatpush1.msra.mxu0 0.0
  %316 = vmatprep.subr.mxu0 0.0
  %317 = vmatpush1.msra.mxu0 0.0
  %318 = vmatprep.subr.mxu0 0.0
  %319 = vmatpush1.msra.mxu0 0.0
  %320 = vmatprep.subr.mxu0 0.0
  %321 = vmatpush1.msra.mxu0 0.0
  %322 = vmatprep.subr.mxu0 0.0
  %323 = vmatpush1.msra.mxu0 0.0
  %324 = vmatprep.subr.mxu0 0.0
  %325 = vmatpush1.msra.mxu0 0.0
  %326 = vmatprep.subr.mxu0 0.0
  %327 = vmatpush1.msra.mxu0 0.0
  %328 = vmatprep.subr.mxu0 0.0
  %329 = vmatpush1.msra.mxu0 0.0
  %330 = vmatprep.subr.mxu0 0.0
  %331 = vmatpush1.msra.mxu0 0.0
  %332 = vmatprep.subr.mxu0 0.0
  %333 = vmatpush1.msra.mxu0 0.0
  %334 = vmatprep.subr.mxu0 0.0
  %335 = vmatpush1.msra.mxu0 0.0
  %336 = vmatprep.subr.mxu0 0.0
  %337 = vmatpush1.msra.mxu0 0.0
  %338 = vmatprep.subr.mxu0 0.0
  %339 = vmatpush1.msra.mxu0 0.0
  %340 = vmatprep.subr.mxu0 0.0
  %341 = vmatpush1.msra.mxu0 0.0
  %342 = vmatprep.subr.mxu0 0.0
  %343 = vmatpush1.msra.mxu0 0.0
  %344 = vmatprep.subr.mxu0 0.0
  %345 = vmatpush1.msra.mxu0 0.0
  %346 = vmatprep.subr.mxu0 0.0
  %347 = vmatpush1.msra.mxu0 0.0
  %348 = vmatprep.subr.mxu0 0.0
  %349 = vmatpush1.msra.mxu0 0.0
  %350 = vmatprep.subr.mxu0 0.0
  %351 = vmatpush1.msra.mxu0 0.0
  %352 = vmatprep.subr.mxu0 0.0
  %353 = vmatpush1.msra.mxu0 0.0
  %354 = vmatprep.subr.mxu0 0.0
  %355 = vmatpush1.msra.mxu0 0.0
  %356 = vmatprep.subr.mxu0 0.0
  %357 = vmatpush1.msra.mxu0 0.0
  %358 = vmatprep.subr.mxu0 0.0
  %359 = vmatpush1.msra.mxu0 0.0
  %360 = vmatprep.subr.mxu0 0.0
  %361 = vmatpush1.msra.mxu0 0.0
  %362 = vmatprep.subr.mxu0 0.0
  %363 = vmatpush1.msra.mxu0 0.0
  %364 = vmatprep.subr.mxu0 0.0
  %365 = vmatpush1.msra.mxu0 0.0
  %366 = vmatprep.mubr.f32.mxu0 0.0
  %367 = vmatmul.mubr.f32.gmra.mrb[0].mxu0 %v300
  %v368 = vpop.f32.mrb[0].mxu0
  %v369 = vadd.f32 0.0, %v368
  %v370 = vpop.f32.mrb[0].mxu0
  %371 = vdwg.mxu0
  %v372 = vadd.f32 %v161, %v369
  %v373 = vxor.u32 %v372, 2147483648
  %v374 = vmul.f32 %v373, 1.442695
  %v375 = vpow.pop %v374
  %v376 = vadd.f32 %v375, 1.0
  %v377 = vrcp.pop %v376
  %v378 = vmul.f32 1.0, %v377
  %v379 = vtanh.pop %v372
  %v380 = vmul.f32 %v378, %v290
  %382 = vrot.lane.b32.xlu0 %v379, 64
  %v383 = vpop.permute.xlu0 %382
  %v385 = vmul.f32 %v378, %v383
  %387 = vrot.lane.b32.xlu0 %v385, 32
  %v388 = vpop.permute.xlu0 %387
  %v390 = vadd.f32 %v380, %v388
  %v391 = vtanh.pop %v390
  %393 = vrot.lane.b32.xlu0 %v391, 64
  %v394 = vpop.permute.xlu0 %393
  %v396 = vmul.f32 %v378, %v394
  %398 = vrot.lane.b32.xlu0 %v396, 32
  %v399 = vpop.permute.xlu0 %398
  %v400 = vsel %vm198, %v399, 0
  %402 = vmatprep.subr.mxu0 0.0
  %403 = vmatpush1.msra.mxu0 %v194
  %404 = vmatprep.subr.mxu0 0.0
  %405 = vmatpush1.msra.mxu0 %v195
  %406 = vmatprep.subr.mxu0 0.0
  %407 = vmatpush1.msra.mxu0 %v196
  %408 = vmatprep.subr.mxu0 0.0
  %409 = vmatpush1.msra.mxu0 %v197
  %410 = vmatprep.subr.mxu0 0.0
  %411 = vmatpush1.msra.mxu0 0.0
  %412 = vmatprep.subr.mxu0 0.0
  %413 = vmatpush1.msra.mxu0 0.0
  %414 = vmatprep.subr.mxu0 0.0
  %415 = vmatpush1.msra.mxu0 0.0
  %416 = vmatprep.subr.mxu0 0.0
  %417 = vmatpush1.msra.mxu0 0.0
  %418 = vmatprep.subr.mxu0 0.0
  %419 = vmatpush1.msra.mxu0 0.0
  %420 = vmatprep.subr.mxu0 0.0
  %421 = vmatpush1.msra.mxu0 0.0
  %422 = vmatprep.subr.mxu0 0.0
  %423 = vmatpush1.msra.mxu0 0.0
  %424 = vmatprep.subr.mxu0 0.0
  %425 = vmatpush1.msra.mxu0 0.0
  %426 = vmatprep.subr.mxu0 0.0
  %427 = vmatpush1.msra.mxu0 0.0
  %428 = vmatprep.subr.mxu0 0.0
  %429 = vmatpush1.msra.mxu0 0.0
  %430 = vmatprep.subr.mxu0 0.0
  %431 = vmatpush1.msra.mxu0 0.0
  %432 = vmatprep.subr.mxu0 0.0
  %433 = vmatpush1.msra.mxu0 0.0
  %434 = vmatprep.subr.mxu0 0.0
  %435 = vmatpush1.msra.mxu0 0.0
  %436 = vmatprep.subr.mxu0 0.0
  %437 = vmatpush1.msra.mxu0 0.0
  %438 = vmatprep.subr.mxu0 0.0
  %439 = vmatpush1.msra.mxu0 0.0
  %440 = vmatprep.subr.mxu0 0.0
  %441 = vmatpush1.msra.mxu0 0.0
  %442 = vmatprep.subr.mxu0 0.0
  %443 = vmatpush1.msra.mxu0 0.0
  %444 = vmatprep.subr.mxu0 0.0
  %445 = vmatpush1.msra.mxu0 0.0
  %446 = vmatprep.subr.mxu0 0.0
  %447 = vmatpush1.msra.mxu0 0.0
  %448 = vmatprep.subr.mxu0 0.0
  %449 = vmatpush1.msra.mxu0 0.0
  %450 = vmatprep.subr.mxu0 0.0
  %451 = vmatpush1.msra.mxu0 0.0
  %452 = vmatprep.subr.mxu0 0.0
  %453 = vmatpush1.msra.mxu0 0.0
  %454 = vmatprep.subr.mxu0 0.0
  %455 = vmatpush1.msra.mxu0 0.0
  %456 = vmatprep.subr.mxu0 0.0
  %457 = vmatpush1.msra.mxu0 0.0
  %458 = vmatprep.subr.mxu0 0.0
  %459 = vmatpush1.msra.mxu0 0.0
  %460 = vmatprep.subr.mxu0 0.0
  %461 = vmatpush1.msra.mxu0 0.0
  %462 = vmatprep.subr.mxu0 0.0
  %463 = vmatpush1.msra.mxu0 0.0
  %464 = vmatprep.subr.mxu0 0.0
  %465 = vmatpush1.msra.mxu0 0.0
  %466 = vmatprep.mubr.f32.mxu0 0.0
  %467 = vmatmul.mubr.f32.gmra.mrb[0].mxu0 %v400
  %v468 = vpop.f32.mrb[0].mxu0
  %v469 = vadd.f32 0.0, %v468
  %v470 = vpop.f32.mrb[0].mxu0
  %471 = vdwg.mxu0
  %v472 = vadd.f32 %v166, %v469
  %v473 = vxor.u32 %v472, 2147483648
  %v474 = vmul.f32 %v473, 1.442695
  %v475 = vpow.pop %v474
  %v476 = vadd.f32 %v475, 1.0
  %v477 = vrcp.pop %v476
  %v478 = vmul.f32 1.0, %v477
  %v479 = vtanh.pop %v472
  %v480 = vmul.f32 %v478, %v390
  %482 = vrot.lane.b32.xlu0 %v479, 64
  %v483 = vpop.permute.xlu0 %482
  %v485 = vmul.f32 %v478, %v483
  %487 = vrot.lane.b32.xlu0 %v485, 32
  %v488 = vpop.permute.xlu0 %487
  %v490 = vadd.f32 %v480, %v488
  %v491 = vtanh.pop %v490
  %493 = vrot.lane.b32.xlu0 %v491, 64
  %v494 = vpop.permute.xlu0 %493
  %v496 = vmul.f32 %v478, %v494
  %498 = vrot.lane.b32.xlu0 %v496, 32
  %v499 = vpop.permute.xlu0 %498
  %v500 = vsel %vm198, %v499, 0
  %502 = vmatprep.subr.mxu0 0.0
  %503 = vmatpush1.msra.mxu0 %v194
  %504 = vmatprep.subr.mxu0 0.0
  %505 = vmatpush1.msra.mxu0 %v195
  %506 = vmatprep.subr.mxu0 0.0
  %507 = vmatpush1.msra.mxu0 %v196
  %508 = vmatprep.subr.mxu0 0.0
  %509 = vmatpush1.msra.mxu0 %v197
  %510 = vmatprep.subr.mxu0 0.0
  %511 = vmatpush1.msra.mxu0 0.0
  %512 = vmatprep.subr.mxu0 0.0
  %513 = vmatpush1.msra.mxu0 0.0
  %514 = vmatprep.subr.mxu0 0.0
  %515 = vmatpush1.msra.mxu0 0.0
  %516 = vmatprep.subr.mxu0 0.0
  %517 = vmatpush1.msra.mxu0 0.0
  %518 = vmatprep.subr.mxu0 0.0
  %519 = vmatpush1.msra.mxu0 0.0
  %520 = vmatprep.subr.mxu0 0.0
  %521 = vmatpush1.msra.mxu0 0.0
  %522 = vmatprep.subr.mxu0 0.0
  %523 = vmatpush1.msra.mxu0 0.0
  %524 = vmatprep.subr.mxu0 0.0
  %525 = vmatpush1.msra.mxu0 0.0
  %526 = vmatprep.subr.mxu0 0.0
  %527 = vmatpush1.msra.mxu0 0.0
  %528 = vmatprep.subr.mxu0 0.0
  %529 = vmatpush1.msra.mxu0 0.0
  %530 = vmatprep.subr.mxu0 0.0
  %531 = vmatpush1.msra.mxu0 0.0
  %532 = vmatprep.subr.mxu0 0.0
  %533 = vmatpush1.msra.mxu0 0.0
  %534 = vmatprep.subr.mxu0 0.0
  %535 = vmatpush1.msra.mxu0 0.0
  %536 = vmatprep.subr.mxu0 0.0
  %537 = vmatpush1.msra.mxu0 0.0
  %538 = vmatprep.subr.mxu0 0.0
  %539 = vmatpush1.msra.mxu0 0.0
  %540 = vmatprep.subr.mxu0 0.0
  %541 = vmatpush1.msra.mxu0 0.0
  %542 = vmatprep.subr.mxu0 0.0
  %543 = vmatpush1.msra.mxu0 0.0
  %544 = vmatprep.subr.mxu0 0.0
  %545 = vmatpush1.msra.mxu0 0.0
  %546 = vmatprep.subr.mxu0 0.0
  %547 = vmatpush1.msra.mxu0 0.0
  %548 = vmatprep.subr.mxu0 0.0
  %549 = vmatpush1.msra.mxu0 0.0
  %550 = vmatprep.subr.mxu0 0.0
  %551 = vmatpush1.msra.mxu0 0.0
  %552 = vmatprep.subr.mxu0 0.0
  %553 = vmatpush1.msra.mxu0 0.0
  %554 = vmatprep.subr.mxu0 0.0
  %555 = vmatpush1.msra.mxu0 0.0
  %556 = vmatprep.subr.mxu0 0.0
  %557 = vmatpush1.msra.mxu0 0.0
  %558 = vmatprep.subr.mxu0 0.0
  %559 = vmatpush1.msra.mxu0 0.0
  %560 = vmatprep.subr.mxu0 0.0
  %561 = vmatpush1.msra.mxu0 0.0
  %562 = vmatprep.subr.mxu0 0.0
  %563 = vmatpush1.msra.mxu0 0.0
  %564 = vmatprep.subr.mxu0 0.0
  %565 = vmatpush1.msra.mxu0 0.0
  %566 = vmatprep.mubr.f32.mxu0 0.0
  %567 = vmatmul.mubr.f32.gmra.mrb[0].mxu0 %v500
  %v568 = vpop.f32.mrb[0].mxu0
  %v569 = vadd.f32 0.0, %v568
  %v570 = vpop.f32.mrb[0].mxu0
  %571 = vdwg.mxu0
  %v572 = vadd.f32 %v171, %v569
  %v573 = vxor.u32 %v572, 2147483648
  %v574 = vmul.f32 %v573, 1.442695
  %v575 = vpow.pop %v574
  %v576 = vadd.f32 %v575, 1.0
  %v577 = vrcp.pop %v576
  %v578 = vmul.f32 1.0, %v577
  %v579 = vtanh.pop %v572
  %v580 = vmul.f32 %v578, %v490
  %582 = vrot.lane.b32.xlu0 %v579, 64
  %v583 = vpop.permute.xlu0 %582
  %v585 = vmul.f32 %v578, %v583
  %587 = vrot.lane.b32.xlu0 %v585, 32
  %v588 = vpop.permute.xlu0 %587
  %v590 = vadd.f32 %v580, %v588
  %v591 = vtanh.pop %v590
  %593 = vrot.lane.b32.xlu0 %v591, 64
  %v594 = vpop.permute.xlu0 %593
  %v596 = vmul.f32 %v578, %v594
  %598 = vrot.lane.b32.xlu0 %v596, 32
  %v599 = vpop.permute.xlu0 %598
  %v600 = vsel %vm198, %v599, 0
  %602 = vmatprep.subr.mxu0 0.0
  %603 = vmatpush1.msra.mxu0 %v194
  %604 = vmatprep.subr.mxu0 0.0
  %605 = vmatpush1.msra.mxu0 %v195
  %606 = vmatprep.subr.mxu0 0.0
  %607 = vmatpush1.msra.mxu0 %v196
  %608 = vmatprep.subr.mxu0 0.0
  %609 = vmatpush1.msra.mxu0 %v197
  %610 = vmatprep.subr.mxu0 0.0
  %611 = vmatpush1.msra.mxu0 0.0
  %612 = vmatprep.subr.mxu0 0.0
  %613 = vmatpush1.msra.mxu0 0.0
  %614 = vmatprep.subr.mxu0 0.0
  %615 = vmatpush1.msra.mxu0 0.0
  %616 = vmatprep.subr.mxu0 0.0
  %617 = vmatpush1.msra.mxu0 0.0
  %618 = vmatprep.subr.mxu0 0.0
  %619 = vmatpush1.msra.mxu0 0.0
  %620 = vmatprep.subr.mxu0 0.0
  %621 = vmatpush1.msra.mxu0 0.0
  %622 = vmatprep.subr.mxu0 0.0
  %623 = vmatpush1.msra.mxu0 0.0
  %624 = vmatprep.subr.mxu0 0.0
  %625 = vmatpush1.msra.mxu0 0.0
  %626 = vmatprep.subr.mxu0 0.0
  %627 = vmatpush1.msra.mxu0 0.0
  %628 = vmatprep.subr.mxu0 0.0
  %629 = vmatpush1.msra.mxu0 0.0
  %630 = vmatprep.subr.mxu0 0.0
  %631 = vmatpush1.msra.mxu0 0.0
  %632 = vmatprep.subr.mxu0 0.0
  %633 = vmatpush1.msra.mxu0 0.0
  %634 = vmatprep.subr.mxu0 0.0
  %635 = vmatpush1.msra.mxu0 0.0
  %636 = vmatprep.subr.mxu0 0.0
  %637 = vmatpush1.msra.mxu0 0.0
  %638 = vmatprep.subr.mxu0 0.0
  %639 = vmatpush1.msra.mxu0 0.0
  %640 = vmatprep.subr.mxu0 0.0
  %641 = vmatpush1.msra.mxu0 0.0
  %642 = vmatprep.subr.mxu0 0.0
  %643 = vmatpush1.msra.mxu0 0.0
  %644 = vmatprep.subr.mxu0 0.0
  %645 = vmatpush1.msra.mxu0 0.0
  %646 = vmatprep.subr.mxu0 0.0
  %647 = vmatpush1.msra.mxu0 0.0
  %648 = vmatprep.subr.mxu0 0.0
  %649 = vmatpush1.msra.mxu0 0.0
  %650 = vmatprep.subr.mxu0 0.0
  %651 = vmatpush1.msra.mxu0 0.0
  %652 = vmatprep.subr.mxu0 0.0
  %653 = vmatpush1.msra.mxu0 0.0
  %654 = vmatprep.subr.mxu0 0.0
  %655 = vmatpush1.msra.mxu0 0.0
  %656 = vmatprep.subr.mxu0 0.0
  %657 = vmatpush1.msra.mxu0 0.0
  %658 = vmatprep.subr.mxu0 0.0
  %659 = vmatpush1.msra.mxu0 0.0
  %660 = vmatprep.subr.mxu0 0.0
  %661 = vmatpush1.msra.mxu0 0.0
  %662 = vmatprep.subr.mxu0 0.0
  %663 = vmatpush1.msra.mxu0 0.0
  %664 = vmatprep.subr.mxu0 0.0
  %665 = vmatpush1.msra.mxu0 0.0
  %666 = vmatprep.mubr.f32.mxu0 0.0
  %667 = vmatmul.mubr.f32.gmra.mrb[0].mxu0 %v600
  %v668 = vpop.f32.mrb[0].mxu0
  %v669 = vadd.f32 0.0, %v668
  %v670 = vpop.f32.mrb[0].mxu0
  %671 = vdwg.mxu0
  %v672 = vadd.f32 %v176, %v669
  %v673 = vxor.u32 %v672, 2147483648
  %v674 = vmul.f32 %v673, 1.442695
  %v675 = vpow.pop %v674
  %v676 = vadd.f32 %v675, 1.0
  %v677 = vrcp.pop %v676
  %v678 = vmul.f32 1.0, %v677
  %v679 = vtanh.pop %v672
  %v680 = vmul.f32 %v678, %v590
  %682 = vrot.lane.b32.xlu0 %v679, 64
  %v683 = vpop.permute.xlu0 %682
  %v685 = vmul.f32 %v678, %v683
  %687 = vrot.lane.b32.xlu0 %v685, 32
  %v688 = vpop.permute.xlu0 %687
  %v690 = vadd.f32 %v680, %v688
  %v691 = vtanh.pop %v690
  %693 = vrot.lane.b32.xlu0 %v691, 64
  %v694 = vpop.permute.xlu0 %693
  %v696 = vmul.f32 %v678, %v694
  %698 = vrot.lane.b32.xlu0 %v696, 32
  %v699 = vpop.permute.xlu0 %698
  %v700 = vsel %vm198, %v699, 0
  %702 = vmatprep.subr.mxu0 0.0
  %703 = vmatpush1.msra.mxu0 %v194
  %704 = vmatprep.subr.mxu0 0.0
  %705 = vmatpush1.msra.mxu0 %v195
  %706 = vmatprep.subr.mxu0 0.0
  %707 = vmatpush1.msra.mxu0 %v196
  %708 = vmatprep.subr.mxu0 0.0
  %709 = vmatpush1.msra.mxu0 %v197
  %710 = vmatprep.subr.mxu0 0.0
  %711 = vmatpush1.msra.mxu0 0.0
  %712 = vmatprep.subr.mxu0 0.0
  %713 = vmatpush1.msra.mxu0 0.0
  %714 = vmatprep.subr.mxu0 0.0
  %715 = vmatpush1.msra.mxu0 0.0
  %716 = vmatprep.subr.mxu0 0.0
  %717 = vmatpush1.msra.mxu0 0.0
  %718 = vmatprep.subr.mxu0 0.0
  %719 = vmatpush1.msra.mxu0 0.0
  %720 = vmatprep.subr.mxu0 0.0
  %721 = vmatpush1.msra.mxu0 0.0
  %722 = vmatprep.subr.mxu0 0.0
  %723 = vmatpush1.msra.mxu0 0.0
  %724 = vmatprep.subr.mxu0 0.0
  %725 = vmatpush1.msra.mxu0 0.0
  %726 = vmatprep.subr.mxu0 0.0
  %727 = vmatpush1.msra.mxu0 0.0
  %728 = vmatprep.subr.mxu0 0.0
  %729 = vmatpush1.msra.mxu0 0.0
  %730 = vmatprep.subr.mxu0 0.0
  %731 = vmatpush1.msra.mxu0 0.0
  %732 = vmatprep.subr.mxu0 0.0
  %733 = vmatpush1.msra.mxu0 0.0
  %734 = vmatprep.subr.mxu0 0.0
  %735 = vmatpush1.msra.mxu0 0.0
  %736 = vmatprep.subr.mxu0 0.0
  %737 = vmatpush1.msra.mxu0 0.0
  %738 = vmatprep.subr.mxu0 0.0
  %739 = vmatpush1.msra.mxu0 0.0
  %740 = vmatprep.subr.mxu0 0.0
  %741 = vmatpush1.msra.mxu0 0.0
  %742 = vmatprep.subr.mxu0 0.0
  %743 = vmatpush1.msra.mxu0 0.0
  %744 = vmatprep.subr.mxu0 0.0
  %745 = vmatpush1.msra.mxu0 0.0
  %746 = vmatprep.subr.mxu0 0.0
  %747 = vmatpush1.msra.mxu0 0.0
  %748 = vmatprep.subr.mxu0 0.0
  %749 = vmatpush1.msra.mxu0 0.0
  %750 = vmatprep.subr.mxu0 0.0
  %751 = vmatpush1.msra.mxu0 0.0
  %752 = vmatprep.subr.mxu0 0.0
  %753 = vmatpush1.msra.mxu0 0.0
  %754 = vmatprep.subr.mxu0 0.0
  %755 = vmatpush1.msra.mxu0 0.0
  %756 = vmatprep.subr.mxu0 0.0
  %757 = vmatpush1.msra.mxu0 0.0
  %758 = vmatprep.subr.mxu0 0.0
  %759 = vmatpush1.msra.mxu0 0.0
  %760 = vmatprep.subr.mxu0 0.0
  %761 = vmatpush1.msra.mxu0 0.0
  %762 = vmatprep.subr.mxu0 0.0
  %763 = vmatpush1.msra.mxu0 0.0
  %764 = vmatprep.subr.mxu0 0.0
  %765 = vmatpush1.msra.mxu0 0.0
  %766 = vmatprep.mubr.f32.mxu0 0.0
  %767 = vmatmul.mubr.f32.gmra.mrb[0].mxu0 %v700
  %v768 = vpop.f32.mrb[0].mxu0
  %v769 = vadd.f32 0.0, %v768
  %v770 = vpop.f32.mrb[0].mxu0
  %771 = vdwg.mxu0
  %v772 = vadd.f32 %v181, %v769
  %v773 = vxor.u32 %v772, 2147483648
  %v774 = vmul.f32 %v773, 1.442695
  %v775 = vpow.pop %v774
  %v776 = vadd.f32 %v775, 1.0
  %v777 = vrcp.pop %v776
  %v778 = vmul.f32 1.0, %v777
  %v779 = vtanh.pop %v772
  %v780 = vmul.f32 %v778, %v690
  %782 = vrot.lane.b32.xlu0 %v779, 64
  %v783 = vpop.permute.xlu0 %782
  %v785 = vmul.f32 %v778, %v783
  %787 = vrot.lane.b32.xlu0 %v785, 32
  %v788 = vpop.permute.xlu0 %787
  %v790 = vadd.f32 %v780, %v788
  %v791 = vtanh.pop %v790
  %793 = vrot.lane.b32.xlu0 %v791, 64
  %v794 = vpop.permute.xlu0 %793
  %v796 = vmul.f32 %v778, %v794
  %798 = vrot.lane.b32.xlu0 %v796, 32
  %v799 = vpop.permute.xlu0 %798
  %v800 = vsel %vm198, %v799, 0
  %802 = vmatprep.subr.mxu0 0.0
  %803 = vmatpush1.msra.mxu0 %v194
  %804 = vmatprep.subr.mxu0 0.0
  %805 = vmatpush1.msra.mxu0 %v195
  %806 = vmatprep.subr.mxu0 0.0
  %807 = vmatpush1.msra.mxu0 %v196
  %808 = vmatprep.subr.mxu0 0.0
  %809 = vmatpush1.msra.mxu0 %v197
  %810 = vmatprep.subr.mxu0 0.0
  %811 = vmatpush1.msra.mxu0 0.0
  %812 = vmatprep.subr.mxu0 0.0
  %813 = vmatpush1.msra.mxu0 0.0
  %814 = vmatprep.subr.mxu0 0.0
  %815 = vmatpush1.msra.mxu0 0.0
  %816 = vmatprep.subr.mxu0 0.0
  %817 = vmatpush1.msra.mxu0 0.0
  %818 = vmatprep.subr.mxu0 0.0
  %819 = vmatpush1.msra.mxu0 0.0
  %820 = vmatprep.subr.mxu0 0.0
  %821 = vmatpush1.msra.mxu0 0.0
  %822 = vmatprep.subr.mxu0 0.0
  %823 = vmatpush1.msra.mxu0 0.0
  %824 = vmatprep.subr.mxu0 0.0
  %825 = vmatpush1.msra.mxu0 0.0
  %826 = vmatprep.subr.mxu0 0.0
  %827 = vmatpush1.msra.mxu0 0.0
  %828 = vmatprep.subr.mxu0 0.0
  %829 = vmatpush1.msra.mxu0 0.0
  %830 = vmatprep.subr.mxu0 0.0
  %831 = vmatpush1.msra.mxu0 0.0
  %832 = vmatprep.subr.mxu0 0.0
  %833 = vmatpush1.msra.mxu0 0.0
  %834 = vmatprep.subr.mxu0 0.0
  %835 = vmatpush1.msra.mxu0 0.0
  %836 = vmatprep.subr.mxu0 0.0
  %837 = vmatpush1.msra.mxu0 0.0
  %838 = vmatprep.subr.mxu0 0.0
  %839 = vmatpush1.msra.mxu0 0.0
  %840 = vmatprep.subr.mxu0 0.0
  %841 = vmatpush1.msra.mxu0 0.0
  %842 = vmatprep.subr.mxu0 0.0
  %843 = vmatpush1.msra.mxu0 0.0
  %844 = vmatprep.subr.mxu0 0.0
  %845 = vmatpush1.msra.mxu0 0.0
  %846 = vmatprep.subr.mxu0 0.0
  %847 = vmatpush1.msra.mxu0 0.0
  %848 = vmatprep.subr.mxu0 0.0
  %849 = vmatpush1.msra.mxu0 0.0
  %850 = vmatprep.subr.mxu0 0.0
  %851 = vmatpush1.msra.mxu0 0.0
  %852 = vmatprep.subr.mxu0 0.0
  %853 = vmatpush1.msra.mxu0 0.0
  %854 = vmatprep.subr.mxu0 0.0
  %855 = vmatpush1.msra.mxu0 0.0
  %856 = vmatprep.subr.mxu0 0.0
  %857 = vmatpush1.msra.mxu0 0.0
  %858 = vmatprep.subr.mxu0 0.0
  %859 = vmatpush1.msra.mxu0 0.0
  %860 = vmatprep.subr.mxu0 0.0
  %861 = vmatpush1.msra.mxu0 0.0
  %862 = vmatprep.subr.mxu0 0.0
  %863 = vmatpush1.msra.mxu0 0.0
  %864 = vmatprep.subr.mxu0 0.0
  %865 = vmatpush1.msra.mxu0 0.0
  %866 = vmatprep.mubr.f32.mxu0 0.0
  %867 = vmatmul.mubr.f32.gmra.mrb[0].mxu0 %v800
  %v868 = vpop.f32.mrb[0].mxu0
  %v869 = vadd.f32 0.0, %v868
  %v870 = vpop.f32.mrb[0].mxu0
  %871 = vdwg.mxu0
  %v872 = vadd.f32 %v186, %v869
  %v873 = vxor.u32 %v872, 2147483648
  %v874 = vmul.f32 %v873, 1.442695
  %v875 = vpow.pop %v874
  %v876 = vadd.f32 %v875, 1.0
  %v877 = vrcp.pop %v876
  %v878 = vmul.f32 1.0, %v877
  %v879 = vtanh.pop %v872
  %v880 = vmul.f32 %v878, %v790
  %882 = vrot.lane.b32.xlu0 %v879, 64
  %v883 = vpop.permute.xlu0 %882
  %v885 = vmul.f32 %v878, %v883
  %887 = vrot.lane.b32.xlu0 %v885, 32
  %v888 = vpop.permute.xlu0 %887
  %v890 = vadd.f32 %v880, %v888
  %v891 = vtanh.pop %v890
  %893 = vrot.lane.b32.xlu0 %v891, 64
  %v894 = vpop.permute.xlu0 %893
  %v896 = vmul.f32 %v878, %v894
  %898 = vrot.lane.b32.xlu0 %v896, 32
  %v899 = vpop.permute.xlu0 %898
  %v900 = vsel %vm198, %v899, 0
  %902 = vmatprep.subr.mxu0 0.0
  %903 = vmatpush1.msra.mxu0 %v194
  %904 = vmatprep.subr.mxu0 0.0
  %905 = vmatpush1.msra.mxu0 %v195
  %906 = vmatprep.subr.mxu0 0.0
  %907 = vmatpush1.msra.mxu0 %v196
  %908 = vmatprep.subr.mxu0 0.0
  %909 = vmatpush1.msra.mxu0 %v197
  %910 = vmatprep.subr.mxu0 0.0
  %911 = vmatpush1.msra.mxu0 0.0
  %912 = vmatprep.subr.mxu0 0.0
  %913 = vmatpush1.msra.mxu0 0.0
  %914 = vmatprep.subr.mxu0 0.0
  %915 = vmatpush1.msra.mxu0 0.0
  %916 = vmatprep.subr.mxu0 0.0
  %917 = vmatpush1.msra.mxu0 0.0
  %918 = vmatprep.subr.mxu0 0.0
  %919 = vmatpush1.msra.mxu0 0.0
  %920 = vmatprep.subr.mxu0 0.0
  %921 = vmatpush1.msra.mxu0 0.0
  %922 = vmatprep.subr.mxu0 0.0
  %923 = vmatpush1.msra.mxu0 0.0
  %924 = vmatprep.subr.mxu0 0.0
  %925 = vmatpush1.msra.mxu0 0.0
  %926 = vmatprep.subr.mxu0 0.0
  %927 = vmatpush1.msra.mxu0 0.0
  %928 = vmatprep.subr.mxu0 0.0
  %929 = vmatpush1.msra.mxu0 0.0
  %930 = vmatprep.subr.mxu0 0.0
  %931 = vmatpush1.msra.mxu0 0.0
  %932 = vmatprep.subr.mxu0 0.0
  %933 = vmatpush1.msra.mxu0 0.0
  %934 = vmatprep.subr.mxu0 0.0
  %935 = vmatpush1.msra.mxu0 0.0
  %936 = vmatprep.subr.mxu0 0.0
  %937 = vmatpush1.msra.mxu0 0.0
  %938 = vmatprep.subr.mxu0 0.0
  %939 = vmatpush1.msra.mxu0 0.0
  %940 = vmatprep.subr.mxu0 0.0
  %941 = vmatpush1.msra.mxu0 0.0
  %942 = vmatprep.subr.mxu0 0.0
  %943 = vmatpush1.msra.mxu0 0.0
  %944 = vmatprep.subr.mxu0 0.0
  %945 = vmatpush1.msra.mxu0 0.0
  %946 = vmatprep.subr.mxu0 0.0
  %947 = vmatpush1.msra.mxu0 0.0
  %948 = vmatprep.subr.mxu0 0.0
  %949 = vmatpush1.msra.mxu0 0.0
  %950 = vmatprep.subr.mxu0 0.0
  %951 = vmatpush1.msra.mxu0 0.0
  %952 = vmatprep.subr.mxu0 0.0
  %953 = vmatpush1.msra.mxu0 0.0
  %954 = vmatprep.subr.mxu0 0.0
  %955 = vmatpush1.msra.mxu0 0.0
  %956 = vmatprep.subr.mxu0 0.0
  %957 = vmatpush1.msra.mxu0 0.0
  %958 = vmatprep.subr.mxu0 0.0
  %959 = vmatpush1.msra.mxu0 0.0
  %960 = vmatprep.subr.mxu0 0.0
  %961 = vmatpush1.msra.mxu0 0.0
  %962 = vmatprep.subr.mxu0 0.0
  %963 = vmatpush1.msra.mxu0 0.0
  %964 = vmatprep.subr.mxu0 0.0
  %965 = vmatpush1.msra.mxu0 0.0
  %966 = vmatprep.mubr.f32.mxu0 0.0
  %967 = vmatmul.mubr.f32.gmra.mrb[0].mxu0 %v900
  %v968 = vpop.f32.mrb[0].mxu0
  %v969 = vadd.f32 0.0, %v968
  %v970 = vpop.f32.mrb[0].mxu0
  %971 = vdwg.mxu0
  %v972 = vadd.f32 %v191, %v969
  %v973 = vxor.u32 %v972, 2147483648
  %v974 = vmul.f32 %v973, 1.442695
  %v975 = vpow.pop %v974
  %v976 = vadd.f32 %v975, 1.0
  %v977 = vrcp.pop %v976
  %v978 = vmul.f32 1.0, %v977
  %v979 = vtanh.pop %v972
  %v980 = vmul.f32 %v978, %v890
  %982 = vrot.lane.b32.xlu0 %v979, 64
  %v983 = vpop.permute.xlu0 %982
  %v985 = vmul.f32 %v978, %v983
  %987 = vrot.lane.b32.xlu0 %v985, 32
  %v988 = vpop.permute.xlu0 %987
  %v990 = vadd.f32 %v980, %v988
  %v991 = vld [vmem:[%s5] sm:$0xff]
  %v992 = vld [vmem:[%s5 + $0x8] sm:$0xff]
  %v993 = vld [vmem:[%s5 + $0x10] sm:$0xff]
  %v994 = vld [vmem:[%s5 + $0x18] sm:$0xff]
  %v995 = vld [vmem:[%s6] sm:$0x1]
  %v997 = vlaneseq
  %v998 = vshrl.u32 %v997, 7
  %v999 = vsub.s32 0, %v998
  %v1000 = vrot.slane %v995, %v999
  %1003 = vrot.lane.b32.xlu0 %v990, 96
  %v1004 = vpop.permute.xlu0 %1003
  %v1005 = vsel %vm198, %v1004, 0
  %1007 = vmatprep.subr.mxu0 0.0
  %1008 = vmatpush1.msra.mxu0 %v991
  %1009 = vmatprep.subr.mxu0 0.0
  %1010 = vmatpush1.msra.mxu0 %v992
  %1011 = vmatprep.subr.mxu0 0.0
  %1012 = vmatpush1.msra.mxu0 %v993
  %1013 = vmatprep.subr.mxu0 0.0
  %1014 = vmatpush1.msra.mxu0 %v994
  %1015 = vmatprep.subr.mxu0 0.0
  %1016 = vmatpush1.msra.mxu0 0.0
  %1017 = vmatprep.subr.mxu0 0.0
  %1018 = vmatpush1.msra.mxu0 0.0
  %1019 = vmatprep.subr.mxu0 0.0
  %1020 = vmatpush1.msra.mxu0 0.0
  %1021 = vmatprep.subr.mxu0 0.0
  %1022 = vmatpush1.msra.mxu0 0.0
  %1023 = vmatprep.subr.mxu0 0.0
  %1024 = vmatpush1.msra.mxu0 0.0
  %1025 = vmatprep.subr.mxu0 0.0
  %1026 = vmatpush1.msra.mxu0 0.0
  %1027 = vmatprep.subr.mxu0 0.0
  %1028 = vmatpush1.msra.mxu0 0.0
  %1029 = vmatprep.subr.mxu0 0.0
  %1030 = vmatpush1.msra.mxu0 0.0
  %1031 = vmatprep.subr.mxu0 0.0
  %1032 = vmatpush1.msra.mxu0 0.0
  %1033 = vmatprep.subr.mxu0 0.0
  %1034 = vmatpush1.msra.mxu0 0.0
  %1035 = vmatprep.subr.mxu0 0.0
  %1036 = vmatpush1.msra.mxu0 0.0
  %1037 = vmatprep.subr.mxu0 0.0
  %1038 = vmatpush1.msra.mxu0 0.0
  %1039 = vmatprep.subr.mxu0 0.0
  %1040 = vmatpush1.msra.mxu0 0.0
  %1041 = vmatprep.subr.mxu0 0.0
  %1042 = vmatpush1.msra.mxu0 0.0
  %1043 = vmatprep.subr.mxu0 0.0
  %1044 = vmatpush1.msra.mxu0 0.0
  %1045 = vmatprep.subr.mxu0 0.0
  %1046 = vmatpush1.msra.mxu0 0.0
  %1047 = vmatprep.subr.mxu0 0.0
  %1048 = vmatpush1.msra.mxu0 0.0
  %1049 = vmatprep.subr.mxu0 0.0
  %1050 = vmatpush1.msra.mxu0 0.0
  %1051 = vmatprep.subr.mxu0 0.0
  %1052 = vmatpush1.msra.mxu0 0.0
  %1053 = vmatprep.subr.mxu0 0.0
  %1054 = vmatpush1.msra.mxu0 0.0
  %1055 = vmatprep.subr.mxu0 0.0
  %1056 = vmatpush1.msra.mxu0 0.0
  %1057 = vmatprep.subr.mxu0 0.0
  %1058 = vmatpush1.msra.mxu0 0.0
  %1059 = vmatprep.subr.mxu0 0.0
  %1060 = vmatpush1.msra.mxu0 0.0
  %1061 = vmatprep.subr.mxu0 0.0
  %1062 = vmatpush1.msra.mxu0 0.0
  %1063 = vmatprep.subr.mxu0 0.0
  %1064 = vmatpush1.msra.mxu0 0.0
  %1065 = vmatprep.subr.mxu0 0.0
  %1066 = vmatpush1.msra.mxu0 0.0
  %1067 = vmatprep.subr.mxu0 0.0
  %1068 = vmatpush1.msra.mxu0 0.0
  %1069 = vmatprep.subr.mxu0 0.0
  %1070 = vmatpush1.msra.mxu0 0.0
  %1071 = vmatprep.mubr.f32.mxu0 0.0
  %1072 = vmatmul.mubr.f32.gmra.mrb[0].mxu0 %v1005
  %v1073 = vpop.f32.mrb[0].mxu0
  %v1074 = vadd.f32 %v1000, %v1073
  %v1075 = vpop.f32.mrb[0].mxu0
  %1076 = vdwg.mxu0
  %vm1077 = vcmask 130048
  %1078 = vst.msk [vmem:[%s13] sm:$0xff] %vm1077, %v1074
  %1080 = vrot.lane.b32.xlu0 %v1074, 112
  %v1081 = vpop.permute.xlu0 %1080
  %1083 = vst.msk [vmem:[%s14] sm:$0xff] %vm1077, %v1081
  %v1084 = vld [vmem:[%s1] sm:$0xff]
  %v1085 = vmul.f32 %v1074, 0.5
  %v1086 = vmul.f32 %v1085, 1.442695
  %v1087 = vpow.pop %v1086
  %1089 = vrot.lane.b32.xlu0 %v1087, 112
  %v1090 = vpop.permute.xlu0 %1089
  %v1092 = vmul.f32 %v1084, %v1090
  %v1093 = vadd.f32 %v1074, %v1092
  %v1094 = vld [vmem:[%s7] sm:$0xff]
  %v1095 = vld [vmem:[%s7 + $0x8] sm:$0xff]
  %v1096 = vld [vmem:[%s9] sm:$0x1]
  %v1098 = vlaneseq
  %v1099 = vshrl.u32 %v1098, 7
  %v1100 = vsub.s32 0, %v1099
  %v1101 = vrot.slane %v1096, %v1100
  %v1104 = vsel %vm1077, %v1093, 0
  %1106 = vmatprep.subr.mxu0 0.0
  %1107 = vmatpush1.msra.mxu0 %v1094
  %1108 = vmatprep.subr.mxu0 0.0
  %1109 = vmatpush1.msra.mxu0 %v1095
  %1110 = vmatprep.subr.mxu0 0.0
  %1111 = vmatpush1.msra.mxu0 0.0
  %1112 = vmatprep.subr.mxu0 0.0
  %1113 = vmatpush1.msra.mxu0 0.0
  %1114 = vmatprep.subr.mxu0 0.0
  %1115 = vmatpush1.msra.mxu0 0.0
  %1116 = vmatprep.subr.mxu0 0.0
  %1117 = vmatpush1.msra.mxu0 0.0
  %1118 = vmatprep.subr.mxu0 0.0
  %1119 = vmatpush1.msra.mxu0 0.0
  %1120 = vmatprep.subr.mxu0 0.0
  %1121 = vmatpush1.msra.mxu0 0.0
  %1122 = vmatprep.subr.mxu0 0.0
  %1123 = vmatpush1.msra.mxu0 0.0
  %1124 = vmatprep.subr.mxu0 0.0
  %1125 = vmatpush1.msra.mxu0 0.0
  %1126 = vmatprep.subr.mxu0 0.0
  %1127 = vmatpush1.msra.mxu0 0.0
  %1128 = vmatprep.subr.mxu0 0.0
  %1129 = vmatpush1.msra.mxu0 0.0
  %1130 = vmatprep.subr.mxu0 0.0
  %1131 = vmatpush1.msra.mxu0 0.0
  %1132 = vmatprep.subr.mxu0 0.0
  %1133 = vmatpush1.msra.mxu0 0.0
  %1134 = vmatprep.subr.mxu0 0.0
  %1135 = vmatpush1.msra.mxu0 0.0
  %1136 = vmatprep.subr.mxu0 0.0
  %1137 = vmatpush1.msra.mxu0 0.0
  %1138 = vmatprep.subr.mxu0 0.0
  %1139 = vmatpush1.msra.mxu0 0.0
  %1140 = vmatprep.subr.mxu0 0.0
  %1141 = vmatpush1.msra.mxu0 0.0
  %1142 = vmatprep.subr.mxu0 0.0
  %1143 = vmatpush1.msra.mxu0 0.0
  %1144 = vmatprep.subr.mxu0 0.0
  %1145 = vmatpush1.msra.mxu0 0.0
  %1146 = vmatprep.subr.mxu0 0.0
  %1147 = vmatpush1.msra.mxu0 0.0
  %1148 = vmatprep.subr.mxu0 0.0
  %1149 = vmatpush1.msra.mxu0 0.0
  %1150 = vmatprep.subr.mxu0 0.0
  %1151 = vmatpush1.msra.mxu0 0.0
  %1152 = vmatprep.subr.mxu0 0.0
  %1153 = vmatpush1.msra.mxu0 0.0
  %1154 = vmatprep.subr.mxu0 0.0
  %1155 = vmatpush1.msra.mxu0 0.0
  %1156 = vmatprep.subr.mxu0 0.0
  %1157 = vmatpush1.msra.mxu0 0.0
  %1158 = vmatprep.subr.mxu0 0.0
  %1159 = vmatpush1.msra.mxu0 0.0
  %1160 = vmatprep.subr.mxu0 0.0
  %1161 = vmatpush1.msra.mxu0 0.0
  %1162 = vmatprep.subr.mxu0 0.0
  %1163 = vmatpush1.msra.mxu0 0.0
  %1164 = vmatprep.subr.mxu0 0.0
  %1165 = vmatpush1.msra.mxu0 0.0
  %1166 = vmatprep.subr.mxu0 0.0
  %1167 = vmatpush1.msra.mxu0 0.0
  %1168 = vmatprep.subr.mxu0 0.0
  %1169 = vmatpush1.msra.mxu0 0.0
  %1170 = vmatprep.mubr.f32.mxu0 0.0
  %1171 = vmatmul.mubr.f32.gmra.mrb[0].mxu0 %v1104
  %v1172 = vpop.f32.mrb[0].mxu0
  %v1173 = vadd.f32 %v1101, %v1172
  %v1174 = vpop.f32.mrb[0].mxu0
  %1175 = vdwg.mxu0
  %v1176 = vld [vmem:[%s8] sm:$0xff]
  %v1177 = vld [vmem:[%s8 + $0x8] sm:$0xff]
  %v1178 = vld [vmem:[%s8 + $0x10] sm:$0xff]
  %v1179 = vld [vmem:[%s8 + $0x18] sm:$0xff]
  %1180 = vmatprep.subr.mxu0 0.0
  %1181 = vmatpush1.msra.mxu0 %v1176
  %1182 = vmatprep.subr.mxu0 0.0
  %1183 = vmatpush1.msra.mxu0 %v1177
  %1184 = vmatprep.subr.mxu0 0.0
  %1185 = vmatpush1.msra.mxu0 %v1178
  %1186 = vmatprep.subr.mxu0 0.0
  %1187 = vmatpush1.msra.mxu0 %v1179
  %1188 = vmatprep.subr.mxu0 0.0
  %1189 = vmatpush1.msra.mxu0 0.0
  %1190 = vmatprep.subr.mxu0 0.0
  %1191 = vmatpush1.msra.mxu0 0.0
  %1192 = vmatprep.subr.mxu0 0.0
  %1193 = vmatpush1.msra.mxu0 0.0
  %1194 = vmatprep.subr.mxu0 0.0
  %1195 = vmatpush1.msra.mxu0 0.0
  %1196 = vmatprep.subr.mxu0 0.0
  %1197 = vmatpush1.msra.mxu0 0.0
  %1198 = vmatprep.subr.mxu0 0.0
  %1199 = vmatpush1.msra.mxu0 0.0
  %1200 = vmatprep.subr.mxu0 0.0
  %1201 = vmatpush1.msra.mxu0 0.0
  %1202 = vmatprep.subr.mxu0 0.0
  %1203 = vmatpush1.msra.mxu0 0.0
  %1204 = vmatprep.subr.mxu0 0.0
  %1205 = vmatpush1.msra.mxu0 0.0
  %1206 = vmatprep.subr.mxu0 0.0
  %1207 = vmatpush1.msra.mxu0 0.0
  %1208 = vmatprep.subr.mxu0 0.0
  %1209 = vmatpush1.msra.mxu0 0.0
  %1210 = vmatprep.subr.mxu0 0.0
  %1211 = vmatpush1.msra.mxu0 0.0
  %1212 = vmatprep.subr.mxu0 0.0
  %1213 = vmatpush1.msra.mxu0 0.0
  %1214 = vmatprep.subr.mxu0 0.0
  %1215 = vmatpush1.msra.mxu0 0.0
  %1216 = vmatprep.subr.mxu0 0.0
  %1217 = vmatpush1.msra.mxu0 0.0
  %1218 = vmatprep.subr.mxu0 0.0
  %1219 = vmatpush1.msra.mxu0 0.0
  %1220 = vmatprep.subr.mxu0 0.0
  %1221 = vmatpush1.msra.mxu0 0.0
  %1222 = vmatprep.subr.mxu0 0.0
  %1223 = vmatpush1.msra.mxu0 0.0
  %1224 = vmatprep.subr.mxu0 0.0
  %1225 = vmatpush1.msra.mxu0 0.0
  %1226 = vmatprep.subr.mxu0 0.0
  %1227 = vmatpush1.msra.mxu0 0.0
  %1228 = vmatprep.subr.mxu0 0.0
  %1229 = vmatpush1.msra.mxu0 0.0
  %1230 = vmatprep.subr.mxu0 0.0
  %1231 = vmatpush1.msra.mxu0 0.0
  %1232 = vmatprep.subr.mxu0 0.0
  %1233 = vmatpush1.msra.mxu0 0.0
  %1234 = vmatprep.subr.mxu0 0.0
  %1235 = vmatpush1.msra.mxu0 0.0
  %1236 = vmatprep.subr.mxu0 0.0
  %1237 = vmatpush1.msra.mxu0 0.0
  %1238 = vmatprep.subr.mxu0 0.0
  %1239 = vmatpush1.msra.mxu0 0.0
  %1240 = vmatprep.subr.mxu0 0.0
  %1241 = vmatpush1.msra.mxu0 0.0
  %1242 = vmatprep.subr.mxu0 0.0
  %1243 = vmatpush1.msra.mxu0 0.0
  %1244 = vmatprep.mubr.f32.mxu0 0.0
  %1245 = vmatmul.mubr.f32.gmra.mrb[0].mxu0 %v200
  %v1246 = vpop.f32.mrb[0].mxu0
  %v1247 = vadd.f32 0.0, %v1246
  %v1248 = vpop.f32.mrb[0].mxu0
  %1249 = vdwg.mxu0
  %v1250 = vadd.f32 %v1173, %v1247
  %v1251 = vxor.u32 %v1250, 2147483648
  %v1252 = vmul.f32 %v1251, 1.442695
  %v1253 = vpow.pop %v1252
  %v1254 = vadd.f32 %v1253, 1.0
  %v1255 = vrcp.pop %v1254
  %v1256 = vmul.f32 1.0, %v1255
  %v1257 = vtanh.pop %v1250
  %v1258 = vmul.f32 %v1256, 0.0
  %1260 = vrot.lane.b32.xlu0 %v1257, 64
  %v1261 = vpop.permute.xlu0 %1260
  %v1263 = vmul.f32 %v1256, %v1261
  %1265 = vrot.lane.b32.xlu0 %v1263, 32
  %v1266 = vpop.permute.xlu0 %1265
  %v1268 = vadd.f32 %v1258, %v1266
  %v1269 = vtanh.pop %v1268
  %1271 = vrot.lane.b32.xlu0 %v1269, 64
  %v1272 = vpop.permute.xlu0 %1271
  %v1274 = vmul.f32 %v1256, %v1272
  %1276 = vrot.lane.b32.xlu0 %v1274, 32
  %v1277 = vpop.permute.xlu0 %1276
  %v1278 = vsel %vm198, %v1277, 0
  %1280 = vmatprep.subr.mxu0 0.0
  %1281 = vmatpush1.msra.mxu0 %v1176
  %1282 = vmatprep.subr.mxu0 0.0
  %1283 = vmatpush1.msra.mxu0 %v1177
  %1284 = vmatprep.subr.mxu0 0.0
  %1285 = vmatpush1.msra.mxu0 %v1178
  %1286 = vmatprep.subr.mxu0 0.0
  %1287 = vmatpush1.msra.mxu0 %v1179
  %1288 = vmatprep.subr.mxu0 0.0
  %1289 = vmatpush1.msra.mxu0 0.0
  %1290 = vmatprep.subr.mxu0 0.0
  %1291 = vmatpush1.msra.mxu0 0.0
  %1292 = vmatprep.subr.mxu0 0.0
  %1293 = vmatpush1.msra.mxu0 0.0
  %1294 = vmatprep.subr.mxu0 0.0
  %1295 = vmatpush1.msra.mxu0 0.0
  %1296 = vmatprep.subr.mxu0 0.0
  %1297 = vmatpush1.msra.mxu0 0.0
  %1298 = vmatprep.subr.mxu0 0.0
  %1299 = vmatpush1.msra.mxu0 0.0
  %1300 = vmatprep.subr.mxu0 0.0
  %1301 = vmatpush1.msra.mxu0 0.0
  %1302 = vmatprep.subr.mxu0 0.0
  %1303 = vmatpush1.msra.mxu0 0.0
  %1304 = vmatprep.subr.mxu0 0.0
  %1305 = vmatpush1.msra.mxu0 0.0
  %1306 = vmatprep.subr.mxu0 0.0
  %1307 = vmatpush1.msra.mxu0 0.0
  %1308 = vmatprep.subr.mxu0 0.0
  %1309 = vmatpush1.msra.mxu0 0.0
  %1310 = vmatprep.subr.mxu0 0.0
  %1311 = vmatpush1.msra.mxu0 0.0
  %1312 = vmatprep.subr.mxu0 0.0
  %1313 = vmatpush1.msra.mxu0 0.0
  %1314 = vmatprep.subr.mxu0 0.0
  %1315 = vmatpush1.msra.mxu0 0.0
  %1316 = vmatprep.subr.mxu0 0.0
  %1317 = vmatpush1.msra.mxu0 0.0
  %1318 = vmatprep.subr.mxu0 0.0
  %1319 = vmatpush1.msra.mxu0 0.0
  %1320 = vmatprep.subr.mxu0 0.0
  %1321 = vmatpush1.msra.mxu0 0.0
  %1322 = vmatprep.subr.mxu0 0.0
  %1323 = vmatpush1.msra.mxu0 0.0
  %1324 = vmatprep.subr.mxu0 0.0
  %1325 = vmatpush1.msra.mxu0 0.0
  %1326 = vmatprep.subr.mxu0 0.0
  %1327 = vmatpush1.msra.mxu0 0.0
  %1328 = vmatprep.subr.mxu0 0.0
  %1329 = vmatpush1.msra.mxu0 0.0
  %1330 = vmatprep.subr.mxu0 0.0
  %1331 = vmatpush1.msra.mxu0 0.0
  %1332 = vmatprep.subr.mxu0 0.0
  %1333 = vmatpush1.msra.mxu0 0.0
  %1334 = vmatprep.subr.mxu0 0.0
  %1335 = vmatpush1.msra.mxu0 0.0
  %1336 = vmatprep.subr.mxu0 0.0
  %1337 = vmatpush1.msra.mxu0 0.0
  %1338 = vmatprep.subr.mxu0 0.0
  %1339 = vmatpush1.msra.mxu0 0.0
  %1340 = vmatprep.subr.mxu0 0.0
  %1341 = vmatpush1.msra.mxu0 0.0
  %1342 = vmatprep.subr.mxu0 0.0
  %1343 = vmatpush1.msra.mxu0 0.0
  %1344 = vmatprep.mubr.f32.mxu0 0.0
  %1345 = vmatmul.mubr.f32.gmra.mrb[0].mxu0 %v1278
  %v1346 = vpop.f32.mrb[0].mxu0
  %v1347 = vadd.f32 0.0, %v1346
  %v1348 = vpop.f32.mrb[0].mxu0
  %1349 = vdwg.mxu0
  %v1350 = vadd.f32 %v1173, %v1347
  %v1351 = vxor.u32 %v1350, 2147483648
  %v1352 = vmul.f32 %v1351, 1.442695
  %v1353 = vpow.pop %v1352
  %v1354 = vadd.f32 %v1353, 1.0
  %v1355 = vrcp.pop %v1354
  %v1356 = vmul.f32 1.0, %v1355
  %v1357 = vtanh.pop %v1350
  %v1358 = vmul.f32 %v1356, %v1268
  %1360 = vrot.lane.b32.xlu0 %v1357, 64
  %v1361 = vpop.permute.xlu0 %1360
  %v1363 = vmul.f32 %v1356, %v1361
  %1365 = vrot.lane.b32.xlu0 %v1363, 32
  %v1366 = vpop.permute.xlu0 %1365
  %v1368 = vadd.f32 %v1358, %v1366
  %v1369 = vtanh.pop %v1368
  %1371 = vrot.lane.b32.xlu0 %v1369, 64
  %v1372 = vpop.permute.xlu0 %1371
  %v1374 = vmul.f32 %v1356, %v1372
  %1376 = vrot.lane.b32.xlu0 %v1374, 32
  %v1377 = vpop.permute.xlu0 %1376
  %v1378 = vsel %vm198, %v1377, 0
  %1380 = vmatprep.subr.mxu0 0.0
  %1381 = vmatpush1.msra.mxu0 %v1176
  %1382 = vmatprep.subr.mxu0 0.0
  %1383 = vmatpush1.msra.mxu0 %v1177
  %1384 = vmatprep.subr.mxu0 0.0
  %1385 = vmatpush1.msra.mxu0 %v1178
  %1386 = vmatprep.subr.mxu0 0.0
  %1387 = vmatpush1.msra.mxu0 %v1179
  %1388 = vmatprep.subr.mxu0 0.0
  %1389 = vmatpush1.msra.mxu0 0.0
  %1390 = vmatprep.subr.mxu0 0.0
  %1391 = vmatpush1.msra.mxu0 0.0
  %1392 = vmatprep.subr.mxu0 0.0
  %1393 = vmatpush1.msra.mxu0 0.0
  %1394 = vmatprep.subr.mxu0 0.0
  %1395 = vmatpush1.msra.mxu0 0.0
  %1396 = vmatprep.subr.mxu0 0.0
  %1397 = vmatpush1.msra.mxu0 0.0
  %1398 = vmatprep.subr.mxu0 0.0
  %1399 = vmatpush1.msra.mxu0 0.0
  %1400 = vmatprep.subr.mxu0 0.0
  %1401 = vmatpush1.msra.mxu0 0.0
  %1402 = vmatprep.subr.mxu0 0.0
  %1403 = vmatpush1.msra.mxu0 0.0
  %1404 = vmatprep.subr.mxu0 0.0
  %1405 = vmatpush1.msra.mxu0 0.0
  %1406 = vmatprep.subr.mxu0 0.0
  %1407 = vmatpush1.msra.mxu0 0.0
  %1408 = vmatprep.subr.mxu0 0.0
  %1409 = vmatpush1.msra.mxu0 0.0
  %1410 = vmatprep.subr.mxu0 0.0
  %1411 = vmatpush1.msra.mxu0 0.0
  %1412 = vmatprep.subr.mxu0 0.0
  %1413 = vmatpush1.msra.mxu0 0.0
  %1414 = vmatprep.subr.mxu0 0.0
  %1415 = vmatpush1.msra.mxu0 0.0
  %1416 = vmatprep.subr.mxu0 0.0
  %1417 = vmatpush1.msra.mxu0 0.0
  %1418 = vmatprep.subr.mxu0 0.0
  %1419 = vmatpush1.msra.mxu0 0.0
  %1420 = vmatprep.subr.mxu0 0.0
  %1421 = vmatpush1.msra.mxu0 0.0
  %1422 = vmatprep.subr.mxu0 0.0
  %1423 = vmatpush1.msra.mxu0 0.0
  %1424 = vmatprep.subr.mxu0 0.0
  %1425 = vmatpush1.msra.mxu0 0.0
  %1426 = vmatprep.subr.mxu0 0.0
  %1427 = vmatpush1.msra.mxu0 0.0
  %1428 = vmatprep.subr.mxu0 0.0
  %1429 = vmatpush1.msra.mxu0 0.0
  %1430 = vmatprep.subr.mxu0 0.0
  %1431 = vmatpush1.msra.mxu0 0.0
  %1432 = vmatprep.subr.mxu0 0.0
  %1433 = vmatpush1.msra.mxu0 0.0
  %1434 = vmatprep.subr.mxu0 0.0
  %1435 = vmatpush1.msra.mxu0 0.0
  %1436 = vmatprep.subr.mxu0 0.0
  %1437 = vmatpush1.msra.mxu0 0.0
  %1438 = vmatprep.subr.mxu0 0.0
  %1439 = vmatpush1.msra.mxu0 0.0
  %1440 = vmatprep.subr.mxu0 0.0
  %1441 = vmatpush1.msra.mxu0 0.0
  %1442 = vmatprep.subr.mxu0 0.0
  %1443 = vmatpush1.msra.mxu0 0.0
  %1444 = vmatprep.mubr.f32.mxu0 0.0
  %1445 = vmatmul.mubr.f32.gmra.mrb[0].mxu0 %v1378
  %v1446 = vpop.f32.mrb[0].mxu0
  %v1447 = vadd.f32 0.0, %v1446
  %v1448 = vpop.f32.mrb[0].mxu0
  %1449 = vdwg.mxu0
  %v1450 = vadd.f32 %v1173, %v1447
  %v1451 = vxor.u32 %v1450, 2147483648
  %v1452 = vmul.f32 %v1451, 1.442695
  %v1453 = vpow.pop %v1452
  %v1454 = vadd.f32 %v1453, 1.0
  %v1455 = vrcp.pop %v1454
  %v1456 = vmul.f32 1.0, %v1455
  %v1457 = vtanh.pop %v1450
  %v1458 = vmul.f32 %v1456, %v1368
  %1460 = vrot.lane.b32.xlu0 %v1457, 64
  %v1461 = vpop.permute.xlu0 %1460
  %v1463 = vmul.f32 %v1456, %v1461
  %1465 = vrot.lane.b32.xlu0 %v1463, 32
  %v1466 = vpop.permute.xlu0 %1465
  %v1468 = vadd.f32 %v1458, %v1466
  %v1469 = vtanh.pop %v1468
  %1471 = vrot.lane.b32.xlu0 %v1469, 64
  %v1472 = vpop.permute.xlu0 %1471
  %v1474 = vmul.f32 %v1456, %v1472
  %1476 = vrot.lane.b32.xlu0 %v1474, 32
  %v1477 = vpop.permute.xlu0 %1476
  %v1478 = vsel %vm198, %v1477, 0
  %1480 = vmatprep.subr.mxu0 0.0
  %1481 = vmatpush1.msra.mxu0 %v1176
  %1482 = vmatprep.subr.mxu0 0.0
  %1483 = vmatpush1.msra.mxu0 %v1177
  %1484 = vmatprep.subr.mxu0 0.0
  %1485 = vmatpush1.msra.mxu0 %v1178
  %1486 = vmatprep.subr.mxu0 0.0
  %1487 = vmatpush1.msra.mxu0 %v1179
  %1488 = vmatprep.subr.mxu0 0.0
  %1489 = vmatpush1.msra.mxu0 0.0
  %1490 = vmatprep.subr.mxu0 0.0
  %1491 = vmatpush1.msra.mxu0 0.0
  %1492 = vmatprep.subr.mxu0 0.0
  %1493 = vmatpush1.msra.mxu0 0.0
  %1494 = vmatprep.subr.mxu0 0.0
  %1495 = vmatpush1.msra.mxu0 0.0
  %1496 = vmatprep.subr.mxu0 0.0
  %1497 = vmatpush1.msra.mxu0 0.0
  %1498 = vmatprep.subr.mxu0 0.0
  %1499 = vmatpush1.msra.mxu0 0.0
  %1500 = vmatprep.subr.mxu0 0.0
  %1501 = vmatpush1.msra.mxu0 0.0
  %1502 = vmatprep.subr.mxu0 0.0
  %1503 = vmatpush1.msra.mxu0 0.0
  %1504 = vmatprep.subr.mxu0 0.0
  %1505 = vmatpush1.msra.mxu0 0.0
  %1506 = vmatprep.subr.mxu0 0.0
  %1507 = vmatpush1.msra.mxu0 0.0
  %1508 = vmatprep.subr.mxu0 0.0
  %1509 = vmatpush1.msra.mxu0 0.0
  %1510 = vmatprep.subr.mxu0 0.0
  %1511 = vmatpush1.msra.mxu0 0.0
  %1512 = vmatprep.subr.mxu0 0.0
  %1513 = vmatpush1.msra.mxu0 0.0
  %1514 = vmatprep.subr.mxu0 0.0
  %1515 = vmatpush1.msra.mxu0 0.0
  %1516 = vmatprep.subr.mxu0 0.0
  %1517 = vmatpush1.msra.mxu0 0.0
  %1518 = vmatprep.subr.mxu0 0.0
  %1519 = vmatpush1.msra.mxu0 0.0
  %1520 = vmatprep.subr.mxu0 0.0
  %1521 = vmatpush1.msra.mxu0 0.0
  %1522 = vmatprep.subr.mxu0 0.0
  %1523 = vmatpush1.msra.mxu0 0.0
  %1524 = vmatprep.subr.mxu0 0.0
  %1525 = vmatpush1.msra.mxu0 0.0
  %1526 = vmatprep.subr.mxu0 0.0
  %1527 = vmatpush1.msra.mxu0 0.0
  %1528 = vmatprep.subr.mxu0 0.0
  %1529 = vmatpush1.msra.mxu0 0.0
  %1530 = vmatprep.subr.mxu0 0.0
  %1531 = vmatpush1.msra.mxu0 0.0
  %1532 = vmatprep.subr.mxu0 0.0
  %1533 = vmatpush1.msra.mxu0 0.0
  %1534 = vmatprep.subr.mxu0 0.0
  %1535 = vmatpush1.msra.mxu0 0.0
  %1536 = vmatprep.subr.mxu0 0.0
  %1537 = vmatpush1.msra.mxu0 0.0
  %1538 = vmatprep.subr.mxu0 0.0
  %1539 = vmatpush1.msra.mxu0 0.0
  %1540 = vmatprep.subr.mxu0 0.0
  %1541 = vmatpush1.msra.mxu0 0.0
  %1542 = vmatprep.subr.mxu0 0.0
  %1543 = vmatpush1.msra.mxu0 0.0
  %1544 = vmatprep.mubr.f32.mxu0 0.0
  %1545 = vmatmul.mubr.f32.gmra.mrb[0].mxu0 %v1478
  %v1546 = vpop.f32.mrb[0].mxu0
  %v1547 = vadd.f32 0.0, %v1546
  %v1548 = vpop.f32.mrb[0].mxu0
  %1549 = vdwg.mxu0
  %v1550 = vadd.f32 %v1173, %v1547
  %v1551 = vxor.u32 %v1550, 2147483648
  %v1552 = vmul.f32 %v1551, 1.442695
  %v1553 = vpow.pop %v1552
  %v1554 = vadd.f32 %v1553, 1.0
  %v1555 = vrcp.pop %v1554
  %v1556 = vmul.f32 1.0, %v1555
  %v1557 = vtanh.pop %v1550
  %v1558 = vmul.f32 %v1556, %v1468
  %1560 = vrot.lane.b32.xlu0 %v1557, 64
  %v1561 = vpop.permute.xlu0 %1560
  %v1563 = vmul.f32 %v1556, %v1561
  %1565 = vrot.lane.b32.xlu0 %v1563, 32
  %v1566 = vpop.permute.xlu0 %1565
  %v1568 = vadd.f32 %v1558, %v1566
  %v1569 = vtanh.pop %v1568
  %1571 = vrot.lane.b32.xlu0 %v1569, 64
  %v1572 = vpop.permute.xlu0 %1571
  %v1574 = vmul.f32 %v1556, %v1572
  %1576 = vrot.lane.b32.xlu0 %v1574, 32
  %v1577 = vpop.permute.xlu0 %1576
  %v1578 = vsel %vm198, %v1577, 0
  %1580 = vmatprep.subr.mxu0 0.0
  %1581 = vmatpush1.msra.mxu0 %v1176
  %1582 = vmatprep.subr.mxu0 0.0
  %1583 = vmatpush1.msra.mxu0 %v1177
  %1584 = vmatprep.subr.mxu0 0.0
  %1585 = vmatpush1.msra.mxu0 %v1178
  %1586 = vmatprep.subr.mxu0 0.0
  %1587 = vmatpush1.msra.mxu0 %v1179
  %1588 = vmatprep.subr.mxu0 0.0
  %1589 = vmatpush1.msra.mxu0 0.0
  %1590 = vmatprep.subr.mxu0 0.0
  %1591 = vmatpush1.msra.mxu0 0.0
  %1592 = vmatprep.subr.mxu0 0.0
  %1593 = vmatpush1.msra.mxu0 0.0
  %1594 = vmatprep.subr.mxu0 0.0
  %1595 = vmatpush1.msra.mxu0 0.0
  %1596 = vmatprep.subr.mxu0 0.0
  %1597 = vmatpush1.msra.mxu0 0.0
  %1598 = vmatprep.subr.mxu0 0.0
  %1599 = vmatpush1.msra.mxu0 0.0
  %1600 = vmatprep.subr.mxu0 0.0
  %1601 = vmatpush1.msra.mxu0 0.0
  %1602 = vmatprep.subr.mxu0 0.0
  %1603 = vmatpush1.msra.mxu0 0.0
  %1604 = vmatprep.subr.mxu0 0.0
  %1605 = vmatpush1.msra.mxu0 0.0
  %1606 = vmatprep.subr.mxu0 0.0
  %1607 = vmatpush1.msra.mxu0 0.0
  %1608 = vmatprep.subr.mxu0 0.0
  %1609 = vmatpush1.msra.mxu0 0.0
  %1610 = vmatprep.subr.mxu0 0.0
  %1611 = vmatpush1.msra.mxu0 0.0
  %1612 = vmatprep.subr.mxu0 0.0
  %1613 = vmatpush1.msra.mxu0 0.0
  %1614 = vmatprep.subr.mxu0 0.0
  %1615 = vmatpush1.msra.mxu0 0.0
  %1616 = vmatprep.subr.mxu0 0.0
  %1617 = vmatpush1.msra.mxu0 0.0
  %1618 = vmatprep.subr.mxu0 0.0
  %1619 = vmatpush1.msra.mxu0 0.0
  %1620 = vmatprep.subr.mxu0 0.0
  %1621 = vmatpush1.msra.mxu0 0.0
  %1622 = vmatprep.subr.mxu0 0.0
  %1623 = vmatpush1.msra.mxu0 0.0
  %1624 = vmatprep.subr.mxu0 0.0
  %1625 = vmatpush1.msra.mxu0 0.0
  %1626 = vmatprep.subr.mxu0 0.0
  %1627 = vmatpush1.msra.mxu0 0.0
  %1628 = vmatprep.subr.mxu0 0.0
  %1629 = vmatpush1.msra.mxu0 0.0
  %1630 = vmatprep.subr.mxu0 0.0
  %1631 = vmatpush1.msra.mxu0 0.0
  %1632 = vmatprep.subr.mxu0 0.0
  %1633 = vmatpush1.msra.mxu0 0.0
  %1634 = vmatprep.subr.mxu0 0.0
  %1635 = vmatpush1.msra.mxu0 0.0
  %1636 = vmatprep.subr.mxu0 0.0
  %1637 = vmatpush1.msra.mxu0 0.0
  %1638 = vmatprep.subr.mxu0 0.0
  %1639 = vmatpush1.msra.mxu0 0.0
  %1640 = vmatprep.subr.mxu0 0.0
  %1641 = vmatpush1.msra.mxu0 0.0
  %1642 = vmatprep.subr.mxu0 0.0
  %1643 = vmatpush1.msra.mxu0 0.0
  %1644 = vmatprep.mubr.f32.mxu0 0.0
  %1645 = vmatmul.mubr.f32.gmra.mrb[0].mxu0 %v1578
  %v1646 = vpop.f32.mrb[0].mxu0
  %v1647 = vadd.f32 0.0, %v1646
  %v1648 = vpop.f32.mrb[0].mxu0
  %1649 = vdwg.mxu0
  %v1650 = vadd.f32 %v1173, %v1647
  %v1651 = vxor.u32 %v1650, 2147483648
  %v1652 = vmul.f32 %v1651, 1.442695
  %v1653 = vpow.pop %v1652
  %v1654 = vadd.f32 %v1653, 1.0
  %v1655 = vrcp.pop %v1654
  %v1656 = vmul.f32 1.0, %v1655
  %v1657 = vtanh.pop %v1650
  %v1658 = vmul.f32 %v1656, %v1568
  %1660 = vrot.lane.b32.xlu0 %v1657, 64
  %v1661 = vpop.permute.xlu0 %1660
  %v1663 = vmul.f32 %v1656, %v1661
  %1665 = vrot.lane.b32.xlu0 %v1663, 32
  %v1666 = vpop.permute.xlu0 %1665
  %v1668 = vadd.f32 %v1658, %v1666
  %v1669 = vtanh.pop %v1668
  %1671 = vrot.lane.b32.xlu0 %v1669, 64
  %v1672 = vpop.permute.xlu0 %1671
  %v1674 = vmul.f32 %v1656, %v1672
  %1676 = vrot.lane.b32.xlu0 %v1674, 32
  %v1677 = vpop.permute.xlu0 %1676
  %v1678 = vsel %vm198, %v1677, 0
  %1680 = vmatprep.subr.mxu0 0.0
  %1681 = vmatpush1.msra.mxu0 %v1176
  %1682 = vmatprep.subr.mxu0 0.0
  %1683 = vmatpush1.msra.mxu0 %v1177
  %1684 = vmatprep.subr.mxu0 0.0
  %1685 = vmatpush1.msra.mxu0 %v1178
  %1686 = vmatprep.subr.mxu0 0.0
  %1687 = vmatpush1.msra.mxu0 %v1179
  %1688 = vmatprep.subr.mxu0 0.0
  %1689 = vmatpush1.msra.mxu0 0.0
  %1690 = vmatprep.subr.mxu0 0.0
  %1691 = vmatpush1.msra.mxu0 0.0
  %1692 = vmatprep.subr.mxu0 0.0
  %1693 = vmatpush1.msra.mxu0 0.0
  %1694 = vmatprep.subr.mxu0 0.0
  %1695 = vmatpush1.msra.mxu0 0.0
  %1696 = vmatprep.subr.mxu0 0.0
  %1697 = vmatpush1.msra.mxu0 0.0
  %1698 = vmatprep.subr.mxu0 0.0
  %1699 = vmatpush1.msra.mxu0 0.0
  %1700 = vmatprep.subr.mxu0 0.0
  %1701 = vmatpush1.msra.mxu0 0.0
  %1702 = vmatprep.subr.mxu0 0.0
  %1703 = vmatpush1.msra.mxu0 0.0
  %1704 = vmatprep.subr.mxu0 0.0
  %1705 = vmatpush1.msra.mxu0 0.0
  %1706 = vmatprep.subr.mxu0 0.0
  %1707 = vmatpush1.msra.mxu0 0.0
  %1708 = vmatprep.subr.mxu0 0.0
  %1709 = vmatpush1.msra.mxu0 0.0
  %1710 = vmatprep.subr.mxu0 0.0
  %1711 = vmatpush1.msra.mxu0 0.0
  %1712 = vmatprep.subr.mxu0 0.0
  %1713 = vmatpush1.msra.mxu0 0.0
  %1714 = vmatprep.subr.mxu0 0.0
  %1715 = vmatpush1.msra.mxu0 0.0
  %1716 = vmatprep.subr.mxu0 0.0
  %1717 = vmatpush1.msra.mxu0 0.0
  %1718 = vmatprep.subr.mxu0 0.0
  %1719 = vmatpush1.msra.mxu0 0.0
  %1720 = vmatprep.subr.mxu0 0.0
  %1721 = vmatpush1.msra.mxu0 0.0
  %1722 = vmatprep.subr.mxu0 0.0
  %1723 = vmatpush1.msra.mxu0 0.0
  %1724 = vmatprep.subr.mxu0 0.0
  %1725 = vmatpush1.msra.mxu0 0.0
  %1726 = vmatprep.subr.mxu0 0.0
  %1727 = vmatpush1.msra.mxu0 0.0
  %1728 = vmatprep.subr.mxu0 0.0
  %1729 = vmatpush1.msra.mxu0 0.0
  %1730 = vmatprep.subr.mxu0 0.0
  %1731 = vmatpush1.msra.mxu0 0.0
  %1732 = vmatprep.subr.mxu0 0.0
  %1733 = vmatpush1.msra.mxu0 0.0
  %1734 = vmatprep.subr.mxu0 0.0
  %1735 = vmatpush1.msra.mxu0 0.0
  %1736 = vmatprep.subr.mxu0 0.0
  %1737 = vmatpush1.msra.mxu0 0.0
  %1738 = vmatprep.subr.mxu0 0.0
  %1739 = vmatpush1.msra.mxu0 0.0
  %1740 = vmatprep.subr.mxu0 0.0
  %1741 = vmatpush1.msra.mxu0 0.0
  %1742 = vmatprep.subr.mxu0 0.0
  %1743 = vmatpush1.msra.mxu0 0.0
  %1744 = vmatprep.mubr.f32.mxu0 0.0
  %1745 = vmatmul.mubr.f32.gmra.mrb[0].mxu0 %v1678
  %v1746 = vpop.f32.mrb[0].mxu0
  %v1747 = vadd.f32 0.0, %v1746
  %v1748 = vpop.f32.mrb[0].mxu0
  %1749 = vdwg.mxu0
  %v1750 = vadd.f32 %v1173, %v1747
  %v1751 = vxor.u32 %v1750, 2147483648
  %v1752 = vmul.f32 %v1751, 1.442695
  %v1753 = vpow.pop %v1752
  %v1754 = vadd.f32 %v1753, 1.0
  %v1755 = vrcp.pop %v1754
  %v1756 = vmul.f32 1.0, %v1755
  %v1757 = vtanh.pop %v1750
  %v1758 = vmul.f32 %v1756, %v1668
  %1760 = vrot.lane.b32.xlu0 %v1757, 64
  %v1761 = vpop.permute.xlu0 %1760
  %v1763 = vmul.f32 %v1756, %v1761
  %1765 = vrot.lane.b32.xlu0 %v1763, 32
  %v1766 = vpop.permute.xlu0 %1765
  %v1768 = vadd.f32 %v1758, %v1766
  %v1769 = vtanh.pop %v1768
  %1771 = vrot.lane.b32.xlu0 %v1769, 64
  %v1772 = vpop.permute.xlu0 %1771
  %v1774 = vmul.f32 %v1756, %v1772
  %1776 = vrot.lane.b32.xlu0 %v1774, 32
  %v1777 = vpop.permute.xlu0 %1776
  %v1778 = vsel %vm198, %v1777, 0
  %1780 = vmatprep.subr.mxu0 0.0
  %1781 = vmatpush1.msra.mxu0 %v1176
  %1782 = vmatprep.subr.mxu0 0.0
  %1783 = vmatpush1.msra.mxu0 %v1177
  %1784 = vmatprep.subr.mxu0 0.0
  %1785 = vmatpush1.msra.mxu0 %v1178
  %1786 = vmatprep.subr.mxu0 0.0
  %1787 = vmatpush1.msra.mxu0 %v1179
  %1788 = vmatprep.subr.mxu0 0.0
  %1789 = vmatpush1.msra.mxu0 0.0
  %1790 = vmatprep.subr.mxu0 0.0
  %1791 = vmatpush1.msra.mxu0 0.0
  %1792 = vmatprep.subr.mxu0 0.0
  %1793 = vmatpush1.msra.mxu0 0.0
  %1794 = vmatprep.subr.mxu0 0.0
  %1795 = vmatpush1.msra.mxu0 0.0
  %1796 = vmatprep.subr.mxu0 0.0
  %1797 = vmatpush1.msra.mxu0 0.0
  %1798 = vmatprep.subr.mxu0 0.0
  %1799 = vmatpush1.msra.mxu0 0.0
  %1800 = vmatprep.subr.mxu0 0.0
  %1801 = vmatpush1.msra.mxu0 0.0
  %1802 = vmatprep.subr.mxu0 0.0
  %1803 = vmatpush1.msra.mxu0 0.0
  %1804 = vmatprep.subr.mxu0 0.0
  %1805 = vmatpush1.msra.mxu0 0.0
  %1806 = vmatprep.subr.mxu0 0.0
  %1807 = vmatpush1.msra.mxu0 0.0
  %1808 = vmatprep.subr.mxu0 0.0
  %1809 = vmatpush1.msra.mxu0 0.0
  %1810 = vmatprep.subr.mxu0 0.0
  %1811 = vmatpush1.msra.mxu0 0.0
  %1812 = vmatprep.subr.mxu0 0.0
  %1813 = vmatpush1.msra.mxu0 0.0
  %1814 = vmatprep.subr.mxu0 0.0
  %1815 = vmatpush1.msra.mxu0 0.0
  %1816 = vmatprep.subr.mxu0 0.0
  %1817 = vmatpush1.msra.mxu0 0.0
  %1818 = vmatprep.subr.mxu0 0.0
  %1819 = vmatpush1.msra.mxu0 0.0
  %1820 = vmatprep.subr.mxu0 0.0
  %1821 = vmatpush1.msra.mxu0 0.0
  %1822 = vmatprep.subr.mxu0 0.0
  %1823 = vmatpush1.msra.mxu0 0.0
  %1824 = vmatprep.subr.mxu0 0.0
  %1825 = vmatpush1.msra.mxu0 0.0
  %1826 = vmatprep.subr.mxu0 0.0
  %1827 = vmatpush1.msra.mxu0 0.0
  %1828 = vmatprep.subr.mxu0 0.0
  %1829 = vmatpush1.msra.mxu0 0.0
  %1830 = vmatprep.subr.mxu0 0.0
  %1831 = vmatpush1.msra.mxu0 0.0
  %1832 = vmatprep.subr.mxu0 0.0
  %1833 = vmatpush1.msra.mxu0 0.0
  %1834 = vmatprep.subr.mxu0 0.0
  %1835 = vmatpush1.msra.mxu0 0.0
  %1836 = vmatprep.subr.mxu0 0.0
  %1837 = vmatpush1.msra.mxu0 0.0
  %1838 = vmatprep.subr.mxu0 0.0
  %1839 = vmatpush1.msra.mxu0 0.0
  %1840 = vmatprep.subr.mxu0 0.0
  %1841 = vmatpush1.msra.mxu0 0.0
  %1842 = vmatprep.subr.mxu0 0.0
  %1843 = vmatpush1.msra.mxu0 0.0
  %1844 = vmatprep.mubr.f32.mxu0 0.0
  %1845 = vmatmul.mubr.f32.gmra.mrb[0].mxu0 %v1778
  %v1846 = vpop.f32.mrb[0].mxu0
  %v1847 = vadd.f32 0.0, %v1846
  %v1848 = vpop.f32.mrb[0].mxu0
  %1849 = vdwg.mxu0
  %v1850 = vadd.f32 %v1173, %v1847
  %v1851 = vxor.u32 %v1850, 2147483648
  %v1852 = vmul.f32 %v1851, 1.442695
  %v1853 = vpow.pop %v1852
  %v1854 = vadd.f32 %v1853, 1.0
  %v1855 = vrcp.pop %v1854
  %v1856 = vmul.f32 1.0, %v1855
  %v1857 = vtanh.pop %v1850
  %v1858 = vmul.f32 %v1856, %v1768
  %1860 = vrot.lane.b32.xlu0 %v1857, 64
  %v1861 = vpop.permute.xlu0 %1860
  %v1863 = vmul.f32 %v1856, %v1861
  %1865 = vrot.lane.b32.xlu0 %v1863, 32
  %v1866 = vpop.permute.xlu0 %1865
  %v1868 = vadd.f32 %v1858, %v1866
  %v1869 = vtanh.pop %v1868
  %1871 = vrot.lane.b32.xlu0 %v1869, 64
  %v1872 = vpop.permute.xlu0 %1871
  %v1874 = vmul.f32 %v1856, %v1872
  %1876 = vrot.lane.b32.xlu0 %v1874, 32
  %v1877 = vpop.permute.xlu0 %1876
  %v1878 = vsel %vm198, %v1877, 0
  %1880 = vmatprep.subr.mxu0 0.0
  %1881 = vmatpush1.msra.mxu0 %v1176
  %1882 = vmatprep.subr.mxu0 0.0
  %1883 = vmatpush1.msra.mxu0 %v1177
  %1884 = vmatprep.subr.mxu0 0.0
  %1885 = vmatpush1.msra.mxu0 %v1178
  %1886 = vmatprep.subr.mxu0 0.0
  %1887 = vmatpush1.msra.mxu0 %v1179
  %1888 = vmatprep.subr.mxu0 0.0
  %1889 = vmatpush1.msra.mxu0 0.0
  %1890 = vmatprep.subr.mxu0 0.0
  %1891 = vmatpush1.msra.mxu0 0.0
  %1892 = vmatprep.subr.mxu0 0.0
  %1893 = vmatpush1.msra.mxu0 0.0
  %1894 = vmatprep.subr.mxu0 0.0
  %1895 = vmatpush1.msra.mxu0 0.0
  %1896 = vmatprep.subr.mxu0 0.0
  %1897 = vmatpush1.msra.mxu0 0.0
  %1898 = vmatprep.subr.mxu0 0.0
  %1899 = vmatpush1.msra.mxu0 0.0
  %1900 = vmatprep.subr.mxu0 0.0
  %1901 = vmatpush1.msra.mxu0 0.0
  %1902 = vmatprep.subr.mxu0 0.0
  %1903 = vmatpush1.msra.mxu0 0.0
  %1904 = vmatprep.subr.mxu0 0.0
  %1905 = vmatpush1.msra.mxu0 0.0
  %1906 = vmatprep.subr.mxu0 0.0
  %1907 = vmatpush1.msra.mxu0 0.0
  %1908 = vmatprep.subr.mxu0 0.0
  %1909 = vmatpush1.msra.mxu0 0.0
  %1910 = vmatprep.subr.mxu0 0.0
  %1911 = vmatpush1.msra.mxu0 0.0
  %1912 = vmatprep.subr.mxu0 0.0
  %1913 = vmatpush1.msra.mxu0 0.0
  %1914 = vmatprep.subr.mxu0 0.0
  %1915 = vmatpush1.msra.mxu0 0.0
  %1916 = vmatprep.subr.mxu0 0.0
  %1917 = vmatpush1.msra.mxu0 0.0
  %1918 = vmatprep.subr.mxu0 0.0
  %1919 = vmatpush1.msra.mxu0 0.0
  %1920 = vmatprep.subr.mxu0 0.0
  %1921 = vmatpush1.msra.mxu0 0.0
  %1922 = vmatprep.subr.mxu0 0.0
  %1923 = vmatpush1.msra.mxu0 0.0
  %1924 = vmatprep.subr.mxu0 0.0
  %1925 = vmatpush1.msra.mxu0 0.0
  %1926 = vmatprep.subr.mxu0 0.0
  %1927 = vmatpush1.msra.mxu0 0.0
  %1928 = vmatprep.subr.mxu0 0.0
  %1929 = vmatpush1.msra.mxu0 0.0
  %1930 = vmatprep.subr.mxu0 0.0
  %1931 = vmatpush1.msra.mxu0 0.0
  %1932 = vmatprep.subr.mxu0 0.0
  %1933 = vmatpush1.msra.mxu0 0.0
  %1934 = vmatprep.subr.mxu0 0.0
  %1935 = vmatpush1.msra.mxu0 0.0
  %1936 = vmatprep.subr.mxu0 0.0
  %1937 = vmatpush1.msra.mxu0 0.0
  %1938 = vmatprep.subr.mxu0 0.0
  %1939 = vmatpush1.msra.mxu0 0.0
  %1940 = vmatprep.subr.mxu0 0.0
  %1941 = vmatpush1.msra.mxu0 0.0
  %1942 = vmatprep.subr.mxu0 0.0
  %1943 = vmatpush1.msra.mxu0 0.0
  %1944 = vmatprep.mubr.f32.mxu0 0.0
  %1945 = vmatmul.mubr.f32.gmra.mrb[0].mxu0 %v1878
  %v1946 = vpop.f32.mrb[0].mxu0
  %v1947 = vadd.f32 0.0, %v1946
  %v1948 = vpop.f32.mrb[0].mxu0
  %1949 = vdwg.mxu0
  %v1950 = vadd.f32 %v1173, %v1947
  %v1951 = vxor.u32 %v1950, 2147483648
  %v1952 = vmul.f32 %v1951, 1.442695
  %v1953 = vpow.pop %v1952
  %v1954 = vadd.f32 %v1953, 1.0
  %v1955 = vrcp.pop %v1954
  %v1956 = vmul.f32 1.0, %v1955
  %v1957 = vtanh.pop %v1950
  %v1958 = vmul.f32 %v1956, %v1868
  %1960 = vrot.lane.b32.xlu0 %v1957, 64
  %v1961 = vpop.permute.xlu0 %1960
  %v1963 = vmul.f32 %v1956, %v1961
  %1965 = vrot.lane.b32.xlu0 %v1963, 32
  %v1966 = vpop.permute.xlu0 %1965
  %v1968 = vadd.f32 %v1958, %v1966
  %v1969 = vtanh.pop %v1968
  %1971 = vrot.lane.b32.xlu0 %v1969, 64
  %v1972 = vpop.permute.xlu0 %1971
  %v1974 = vmul.f32 %v1956, %v1972
  %v1975 = vld [vmem:[%s10] sm:$0xff]
  %v1976 = vld [vmem:[%s10 + $0x8] sm:$0xff]
  %v1977 = vld [vmem:[%s10 + $0x10] sm:$0xff]
  %v1978 = vld [vmem:[%s10 + $0x18] sm:$0xff]
  %v1979 = vld [vmem:[%s11] sm:$0x1]
  %v1981 = vlaneseq
  %v1982 = vshrl.u32 %v1981, 7
  %v1983 = vsub.s32 0, %v1982
  %v1984 = vrot.slane %v1979, %v1983
  %1987 = vrot.lane.b32.xlu0 %v1974, 32
  %v1988 = vpop.permute.xlu0 %1987
  %v1989 = vsel %vm198, %v1988, 0
  %1991 = vmatprep.subr.mxu0 0.0
  %1992 = vmatpush1.msra.mxu0 %v1975
  %1993 = vmatprep.subr.mxu0 0.0
  %1994 = vmatpush1.msra.mxu0 %v1976
  %1995 = vmatprep.subr.mxu0 0.0
  %1996 = vmatpush1.msra.mxu0 %v1977
  %1997 = vmatprep.subr.mxu0 0.0
  %1998 = vmatpush1.msra.mxu0 %v1978
  %1999 = vmatprep.subr.mxu0 0.0
  %2000 = vmatpush1.msra.mxu0 0.0
  %2001 = vmatprep.subr.mxu0 0.0
  %2002 = vmatpush1.msra.mxu0 0.0
  %2003 = vmatprep.subr.mxu0 0.0
  %2004 = vmatpush1.msra.mxu0 0.0
  %2005 = vmatprep.subr.mxu0 0.0
  %2006 = vmatpush1.msra.mxu0 0.0
  %2007 = vmatprep.subr.mxu0 0.0
  %2008 = vmatpush1.msra.mxu0 0.0
  %2009 = vmatprep.subr.mxu0 0.0
  %2010 = vmatpush1.msra.mxu0 0.0
  %2011 = vmatprep.subr.mxu0 0.0
  %2012 = vmatpush1.msra.mxu0 0.0
  %2013 = vmatprep.subr.mxu0 0.0
  %2014 = vmatpush1.msra.mxu0 0.0
  %2015 = vmatprep.subr.mxu0 0.0
  %2016 = vmatpush1.msra.mxu0 0.0
  %2017 = vmatprep.subr.mxu0 0.0
  %2018 = vmatpush1.msra.mxu0 0.0
  %2019 = vmatprep.subr.mxu0 0.0
  %2020 = vmatpush1.msra.mxu0 0.0
  %2021 = vmatprep.subr.mxu0 0.0
  %2022 = vmatpush1.msra.mxu0 0.0
  %2023 = vmatprep.subr.mxu0 0.0
  %2024 = vmatpush1.msra.mxu0 0.0
  %2025 = vmatprep.subr.mxu0 0.0
  %2026 = vmatpush1.msra.mxu0 0.0
  %2027 = vmatprep.subr.mxu0 0.0
  %2028 = vmatpush1.msra.mxu0 0.0
  %2029 = vmatprep.subr.mxu0 0.0
  %2030 = vmatpush1.msra.mxu0 0.0
  %2031 = vmatprep.subr.mxu0 0.0
  %2032 = vmatpush1.msra.mxu0 0.0
  %2033 = vmatprep.subr.mxu0 0.0
  %2034 = vmatpush1.msra.mxu0 0.0
  %2035 = vmatprep.subr.mxu0 0.0
  %2036 = vmatpush1.msra.mxu0 0.0
  %2037 = vmatprep.subr.mxu0 0.0
  %2038 = vmatpush1.msra.mxu0 0.0
  %2039 = vmatprep.subr.mxu0 0.0
  %2040 = vmatpush1.msra.mxu0 0.0
  %2041 = vmatprep.subr.mxu0 0.0
  %2042 = vmatpush1.msra.mxu0 0.0
  %2043 = vmatprep.subr.mxu0 0.0
  %2044 = vmatpush1.msra.mxu0 0.0
  %2045 = vmatprep.subr.mxu0 0.0
  %2046 = vmatpush1.msra.mxu0 0.0
  %2047 = vmatprep.subr.mxu0 0.0
  %2048 = vmatpush1.msra.mxu0 0.0
  %2049 = vmatprep.subr.mxu0 0.0
  %2050 = vmatpush1.msra.mxu0 0.0
  %2051 = vmatprep.subr.mxu0 0.0
  %2052 = vmatpush1.msra.mxu0 0.0
  %2053 = vmatprep.subr.mxu0 0.0
  %2054 = vmatpush1.msra.mxu0 0.0
  %2055 = vmatprep.mubr.f32.mxu0 0.0
  %2056 = vmatmul.mubr.f32.gmra.mrb[0].mxu0 %v1278
  %v2057 = vpop.f32.mrb[0].mxu0
  %v2058 = vadd.f32 %v1984, %v2057
  %v2059 = vpop.f32.mrb[0].mxu0
  %2060 = vmatprep.mubr.f32.mxu0 0.0
  %2061 = vmatmul.mubr.f32.gmra.mrb[0].mxu0 %v1378
  %v2062 = vpop.f32.mrb[0].mxu0
  %v2063 = vadd.f32 %v1984, %v2062
  %v2064 = vpop.f32.mrb[0].mxu0
  %2065 = vmatprep.mubr.f32.mxu0 0.0
  %2066 = vmatmul.mubr.f32.gmra.mrb[0].mxu0 %v1478
  %v2067 = vpop.f32.mrb[0].mxu0
  %v2068 = vadd.f32 %v1984, %v2067
  %v2069 = vpop.f32.mrb[0].mxu0
  %2070 = vmatprep.mubr.f32.mxu0 0.0
  %2071 = vmatmul.mubr.f32.gmra.mrb[0].mxu0 %v1578
  %v2072 = vpop.f32.mrb[0].mxu0
  %v2073 = vadd.f32 %v1984, %v2072
  %v2074 = vpop.f32.mrb[0].mxu0
  %2075 = vmatprep.mubr.f32.mxu0 0.0
  %2076 = vmatmul.mubr.f32.gmra.mrb[0].mxu0 %v1678
  %v2077 = vpop.f32.mrb[0].mxu0
  %v2078 = vadd.f32 %v1984, %v2077
  %v2079 = vpop.f32.mrb[0].mxu0
  %2080 = vmatprep.mubr.f32.mxu0 0.0
  %2081 = vmatmul.mubr.f32.gmra.mrb[0].mxu0 %v1778
  %v2082 = vpop.f32.mrb[0].mxu0
  %v2083 = vadd.f32 %v1984, %v2082
  %v2084 = vpop.f32.mrb[0].mxu0
  %2085 = vmatprep.mubr.f32.mxu0 0.0
  %2086 = vmatmul.mubr.f32.gmra.mrb[0].mxu0 %v1878
  %v2087 = vpop.f32.mrb[0].mxu0
  %v2088 = vadd.f32 %v1984, %v2087
  %v2089 = vpop.f32.mrb[0].mxu0
  %2090 = vmatprep.mubr.f32.mxu0 0.0
  %2091 = vmatmul.mubr.f32.gmra.mrb[0].mxu0 %v1989
  %v2092 = vpop.f32.mrb[0].mxu0
  %v2093 = vadd.f32 %v1984, %v2092
  %v2094 = vpop.f32.mrb[0].mxu0
  %2095 = vdwg.mxu0
  %2096 = vst.msk [vmem:[%s12] sm:$0xff] %vm60, %v2058
  %2097 = vst.msk [vmem:[%s12 + $0x8] sm:$0xff] %vm60, %v2063
  %2098 = vst.msk [vmem:[%s12 + $0x10] sm:$0xff] %vm60, %v2068
  %2099 = vst.msk [vmem:[%s12 + $0x18] sm:$0xff] %vm60, %v2073
  %2100 = vst.msk [vmem:[%s12 + $0x20] sm:$0xff] %vm60, %v2078
  %2101 = vst.msk [vmem:[%s12 + $0x28] sm:$0xff] %vm60, %v2083
  %2102 = vst.msk [vmem:[%s12 + $0x30] sm:$0xff] %vm60, %v2088
  %2103 = vst.msk [vmem:[%s12 + $0x38] sm:$0xff] %vm60, %v2093
  // Predicated region
  $region50: #{seqvae_forward.1} parent=0 // pred_check
    _
  $region51: #{seqvae_forward.1} parent=0 // pred_check_branch
    %2105 = sbr.rel (0) target = $region53
  $region52: #{seqvae_forward.1} parent=0 // pred_region
    _
  $region53: #{seqvae_forward.1} parent=0 // pred_fallthru
    _
  // Predicated region
  $region54: #{seqvae_forward.1} parent=0 // pred_check
    _
  $region55: #{seqvae_forward.1} parent=0 // pred_check_branch
    %2107 = sbr.rel (0) target = $region57
  $region56: #{seqvae_forward.1} parent=0 // pred_region
    _
  $region57: #{seqvae_forward.1} parent=0 // pred_fallthru
    _
  // Predicated region
  $region58: #{seqvae_forward.1} parent=0 // pred_check
    _
  $region59: #{seqvae_forward.1} parent=0 // pred_check_branch
    %2109 = sbr.rel (0) target = $region61
  $region60: #{seqvae_forward.1} parent=0 // pred_region
    _
  $region61: #{seqvae_forward.1} parent=0 // pred_fallthru
    _
  // Predicated region
  $region62: #{seqvae_forward.1} parent=0 // pred_check
    _
  $region63: #{seqvae_forward.1} parent=0 // pred_check_branch
    %2111 = sbr.rel (0) target = $region65
  $region64: #{seqvae_forward.1} parent=0 // pred_region
    _
  $region65: #{seqvae_forward.1} parent=0 // pred_fallthru
    _
  // Predicated region
  $region66: #{seqvae_forward.1} parent=0 // pred_check
    _
  $region67: #{seqvae_forward.1} parent=0 // pred_check_branch
    %2113 = sbr.rel (0) target = $region69
  $region68: #{seqvae_forward.1} parent=0 // pred_region
    _
  $region69: #{seqvae_forward.1} parent=0 // pred_fallthru
    _
  // Predicated region
  $region70: #{seqvae_forward.1} parent=0 // pred_check
    _
  $region71: #{seqvae_forward.1} parent=0 // pred_check_branch
    %2115 = sbr.rel (0) target = $region73
  $region72: #{seqvae_forward.1} parent=0 // pred_region
    _
  $region73: #{seqvae_forward.1} parent=0 // pred_fallthru
    _

</llo_original>
